<compile_context>
chip_gen: v7x
topology: tpu7x:2x2x1
jax: 0.10.0
libtpu: 0.0.40
codegen_flags: <defaults>
</compile_context>

<pallas_src>
import functools

import numpy as np

import jax
import jax.numpy as jnp
from jax import lax
from jax.experimental import pallas as pl
from jax.experimental.pallas import tpu as pltpu


def _ceil_to(v, m):
    return ((v + m - 1) // m) * m


# ----------------------------------------------------------------------------
# Fused kernel
# ----------------------------------------------------------------------------
def _fused_irb_kernel(*refs, has_expand, has_residual, stride, tho, Wp, hidden_p):
    """One (batch image, row tile) step of the fused inverted-residual block.

    refs (in order):
      x_ref   : (H*Wp, cin_p)     resident full image, rows flattened
      [we_ref : (cin_p, hidden_p) bf16 expand weight (BN folded)]
      [b1_ref : (1, hidden_p)]
      wd_ref  : (9, hidden_p)     depthwise 3x3 weights (BN folded), f32
      b2_ref  : (1, hidden_p)
      wp_ref  : (hidden_p, cout_p) bf16 project weight (BN folded)
      b3_ref  : (1, cout_p)
      ml_ref  : left-edge 0/1 mask   ((rows,1) stride1 / (Wo,1) stride2)
      [mr_ref : (rows, 1)            right-edge 0/1 mask (stride1 only)]
      o_ref   : output row tile      ((rows, cout_p) / (rows//4, cout_p))
      h2d_ref : ((tho+2)*Wp + 16, hidden_p) f32 scratch: expanded tile + halo,
                flattened, 8-row zero guards at both ends (aligned stores).
      [acc_ref: (rows//4, hidden_p)  f32 strided depthwise accumulator (stride2)]
    """
    refs = list(refs)
    x_ref = refs.pop(0)
    we_ref = b1_ref = None
    if has_expand:
        we_ref, b1_ref = refs.pop(0), refs.pop(0)
    wd_ref, b2_ref = refs.pop(0), refs.pop(0)
    wp_ref, b3_ref = refs.pop(0), refs.pop(0)
    ml_ref = refs.pop(0)
    mr_ref = refs.pop(0) if stride == 1 else None
    o_ref = refs.pop(0)
    h2d_ref = refs.pop(0)
    acc_ref = refs.pop(0) if stride == 2 else None

    f32, bf16 = jnp.float32, jnp.bfloat16
    t = pl.program_id(1)
    nt = pl.num_programs(1)
    r0 = t * tho                      # first image row handled by this tile
    rows = tho * Wp
    CORE = 8 + Wp                     # scratch row where image row r0 lands

    def expand(start, count):
        piece = x_ref[pl.ds(start, count), :]
        if has_expand:
            y = jnp.dot(piece.astype(bf16), we_ref[...],
                        preferred_element_type=f32)
            return jnp.clip(y + b1_ref[...], 0.0, 6.0)
        return piece.astype(f32)

    # -- Stage 1: expand 1x1 (+BN+ReLU6) into the aligned halo'd scratch --------
    h2d_ref[0:8, :] = jnp.zeros((8, hidden_p), f32)               # top guard
    h2d_ref[CORE:CORE + rows, :] = expand(pl.multiple_of(r0 * Wp, Wp), rows)

    @pl.when(t == 0)
    def _():                                                      # image row -1
        h2d_ref[8:8 + Wp, :] = jnp.zeros((Wp, hidden_p), f32)

    @pl.when(t > 0)
    def _():
        h2d_ref[8:8 + Wp, :] = expand(pl.multiple_of((r0 - 1) * Wp, Wp), Wp)

    if stride == 1:
        # bottom halo row + bottom guard (only the stride-1 taps read them)
        h2d_ref[CORE + rows + Wp:CORE + rows + Wp + 8, :] = jnp.zeros(
            (8, hidden_p), f32)

        @pl.when(t == nt - 1)
        def _():
            h2d_ref[CORE + rows:CORE + rows + Wp, :] = jnp.zeros(
                (Wp, hidden_p), f32)

        @pl.when(t < nt - 1)
        def _():
            h2d_ref[CORE + rows:CORE + rows + Wp, :] = expand(
                pl.multiple_of((r0 + tho) * Wp, Wp), Wp)

    # -- Stage 2: depthwise 3x3 (+BN+ReLU6);  Stage 3: project 1x1 (+BN) --------
    ml = ml_ref[...]
    if stride == 1:
        mr = mr_ref[...]
        acc = jnp.zeros((rows, hidden_p), f32)
        for ky in range(3):
            for kx in range(3):
                off = 7 + ky * Wp + kx            # kx==1 taps 8-sublane aligned
                tap = h2d_ref[off:off + rows, :]
                if kx == 0:
                    tap = tap * ml
                elif kx == 2:
                    tap = tap * mr
                acc = acc + tap * wd_ref[ky * 3 + kx:ky * 3 + kx + 1, :]
        acc = jnp.clip(acc + b2_ref[...], 0.0, 6.0)
        y = jnp.dot(acc.astype(bf16), wp_ref[...], preferred_element_type=f32)
        y = y + b3_ref[...]
        if has_residual:
            y = y + x_ref[pl.ds(pl.multiple_of(r0 * Wp, Wp), rows), :].astype(f32)
        o_ref[...] = y.astype(o_ref.dtype)
    else:
        # Strided depthwise: only even centres are computed, then one 4x-smaller
        # project matmul and a 4x-smaller (lane-dense) output write.
        Wo = Wp // 2
        for ro in range(tho // 2):
            a = jnp.zeros((Wo, hidden_p), f32)
            for ky in range(3):
                for kx in range(3):
                    start = 7 + kx + (ky + 2 * ro) * Wp
                    tap = h2d_ref[pl.ds(start, Wo, stride=2), :]
                    if kx == 0:
                        tap = tap * ml            # left image edge (out col 0)
                    a = a + tap * wd_ref[ky * 3 + kx:ky * 3 + kx + 1, :]
            a = jnp.clip(a + b2_ref[...], 0.0, 6.0)
            acc_ref[ro * Wo:(ro + 1) * Wo, :] = a
        y = jnp.dot(acc_ref[...].astype(bf16), wp_ref[...],
                    preferred_element_type=f32) + b3_ref[...]
        o_ref[...] = y.astype(o_ref.dtype)


# ----------------------------------------------------------------------------
# Wrapper around pallas_call
# ----------------------------------------------------------------------------
def _choose_row_tile(H, Wp, hidden_p, stride, budget_bytes=8 << 20):
    """Largest H-divisor input-row tile whose f32 scratch fits the budget."""
    def ok(d):
        if d % stride:
            return False
        if stride == 2:
            out_blk = (d // 2) * (Wp // 2)
            if out_blk % 8 and d != H:
                return False
        return True

    def vmem(d):
        b = ((d + 2) * Wp + 16) * hidden_p * 4
        if stride == 2:
            b += (d // 2) * (Wp // 2) * hidden_p * 4
        return b

    cands = [d for d in range(1, H + 1) if H % d == 0 and ok(d)]
    fitting = [d for d in cands if vmem(d) <= budget_bytes]
    multi = [d for d in fitting if H // d >= 2]      # >=2 steps for megacore
    if multi:
        return max(multi)
    if fitting:
        return max(fitting)
    return min(cands)


def fused_inverted_residual(x_flat, H, Wp, W, *, we, b1, wd, b2, wp, b3,
                            residual, stride):
    """x_flat: (N, H*Wp, cin_p) NHWC-flattened (W-padded) input."""
    N, HW, cin_p = x_flat.shape
    assert HW == H * Wp and Wp % 8 == 0
    hidden_p = wd.shape[-1]
    cout_p = wp.shape[-1]
    has_expand = we is not None
    if not has_expand:
        assert hidden_p == cin_p
    if residual:
        assert cin_p == cout_p

    tho = _choose_row_tile(H, Wp, hidden_p, stride)
    HT = H // tho
    rows = tho * Wp

    const = lambda n, t: (0, 0)
    in_specs = [pl.BlockSpec((None, HW, cin_p), lambda n, t: (n, 0, 0))]
    args = [x_flat]
    if has_expand:
        in_specs += [pl.BlockSpec((cin_p, hidden_p), const),
                     pl.BlockSpec((1, hidden_p), const)]
        args += [we, b1.reshape(1, hidden_p)]
    in_specs += [pl.BlockSpec((9, hidden_p), const),
                 pl.BlockSpec((1, hidden_p), const),
                 pl.BlockSpec((hidden_p, cout_p), const),
                 pl.BlockSpec((1, cout_p), const)]
    args += [wd, b2.reshape(1, hidden_p), wp, b3.reshape(1, cout_p)]

    # 0/1 masks killing the depthwise column wrap-around at the image edges.
    if stride == 1:
        col = np.arange(rows) % Wp
        ml = jnp.asarray((col != 0).astype(np.float32)[:, None])
        mr = jnp.asarray((col != W - 1).astype(np.float32)[:, None])
        in_specs += [pl.BlockSpec((rows, 1), const),
                     pl.BlockSpec((rows, 1), const)]
        args += [ml, mr]
        out_rows_total, out_rows_blk = H * Wp, rows
        scratch = [pltpu.VMEM(((tho + 2) * Wp + 16, hidden_p), jnp.float32)]
    else:
        Wo = Wp // 2
        tho_out = tho // 2
        ml = jnp.asarray((np.arange(Wo) != 0).astype(np.float32)[:, None])
        in_specs += [pl.BlockSpec((Wo, 1), const)]
        args += [ml]
        out_rows_total, out_rows_blk = (H // 2) * Wo, tho_out * Wo
        scratch = [pltpu.VMEM(((tho + 2) * Wp + 16, hidden_p), jnp.float32),
                   pltpu.VMEM((out_rows_blk, hidden_p), jnp.float32)]

    kernel = functools.partial(
        _fused_irb_kernel, has_expand=has_expand, has_residual=residual,
        stride=stride, tho=tho, Wp=Wp, hidden_p=hidden_p)

    return pl.pallas_call(
        kernel,
        out_shape=jax.ShapeDtypeStruct((N, out_rows_total, cout_p), x_flat.dtype),
        grid=(N, HT),
        in_specs=in_specs,
        out_specs=pl.BlockSpec((None, out_rows_blk, cout_p), lambda n, t: (n, t, 0)),
        scratch_shapes=scratch,
        compiler_params=pltpu.CompilerParams(
            dimension_semantics=("parallel", "parallel"),
            vmem_limit_bytes=48 * 1024 * 1024),
    )(*args)


# ----------------------------------------------------------------------------
# Module
# ----------------------------------------------------------------------------
def _fold_bn(key, c, eps=1e-5):
    """Deterministic inference-mode BN params, folded into (scale, bias)."""
    k1, k2, k3, k4 = jax.random.split(key, 4)
    gamma = 1.0 + 0.1 * jax.random.normal(k1, (c,), jnp.float32)
    beta = 0.1 * jax.random.normal(k2, (c,), jnp.float32)
    mean = 0.1 * jax.random.normal(k3, (c,), jnp.float32)
    var = jnp.abs(jax.random.normal(k4, (c,), jnp.float32)) + 0.5
    scale = gamma / jnp.sqrt(var + eps)
    bias = beta - mean * scale
    return scale, bias


def _pad_to(a, shape):
    out = jnp.zeros(shape, a.dtype)
    return out.at[tuple(slice(0, s) for s in a.shape)].set(a)


class InvertedResidualPallas:
    """MobileNetV2 InvertedResidual block (inference) backed by one fused Pallas kernel."""

    def __init__(self, in_planes, out_planes, stride, expand_ratio, key):
        assert stride in (1, 2)
        self.cin, self.cout, self.stride = in_planes, out_planes, stride
        self.hidden = int(round(in_planes * expand_ratio))
        self.expand = expand_ratio != 1
        self.use_res_connect = stride == 1 and in_planes == out_planes

        # Lane-dense padded dims (output / hidden padded to 128-lane multiples;
        # input channels padded only when the residual add needs full width).
        self.cout_p = _ceil_to(out_planes, 128)
        self.cin_p = self.cout_p if self.use_res_connect else in_planes
        self.hidden_p = _ceil_to(self.hidden, 128) if self.expand else self.cin_p

        keys = jax.random.split(key, 6)
        if self.expand:
            w = 0.1 * jax.random.normal(keys[0], (self.cin, self.hidden), jnp.float32)
            s, b = _fold_bn(keys[1], self.hidden)
            we = (w * s[None, :]).astype(jnp.bfloat16)        # bf16 MXU operand
            self.we_f32, self.b1_f32 = we.astype(jnp.float32), b
            self.we = _pad_to(we, (self.cin_p, self.hidden_p))
            self.b1 = _pad_to(b, (self.hidden_p,))
        else:
            self.we = self.b1 = None

        wd = 0.1 * jax.random.normal(keys[2], (3, 3, self.hidden), jnp.float32)
        s, b = _fold_bn(keys[3], self.hidden)
        wd9 = (wd * s[None, None, :]).reshape(9, self.hidden)   # depthwise stays f32
        self.wd9_f32, self.b2_f32 = wd9, b
        self.wd = _pad_to(wd9, (9, self.hidden_p))
        self.b2 = _pad_to(b, (self.hidden_p,))

        wp = 0.1 * jax.random.normal(keys[4], (self.hidden, self.cout), jnp.float32)
        s, b = _fold_bn(keys[5], self.cout)
        wp = (wp * s[None, :]).astype(jnp.bfloat16)             # bf16 MXU operand
        self.wp_f32, self.b3_f32 = wp.astype(jnp.float32), b
        self.wp = _pad_to(wp, (self.hidden_p, self.cout_p))
        self.b3 = _pad_to(b, (self.cout_p,))

    def __call__(self, x_nchw):
        N, C, H, W = x_nchw.shape
        assert C == self.cin
        Wp = _ceil_to(W, 8)
        x = jnp.transpose(x_nchw, (0, 2, 3, 1))                 # NCHW -> NHWC
        pad_w, pad_c = Wp - W, self.cin_p - C
        if pad_w or pad_c:
            x = jnp.pad(x, ((0, 0), (0, 0), (0, pad_w), (0, pad_c)))
        x_flat = x.reshape(N, H * Wp, self.cin_p)

        def run(stride):
            return fused_inverted_residual(
                x_flat, H, Wp, W, we=self.we, b1=self.b1, wd=self.wd,
                b2=self.b2, wp=self.wp, b3=self.b3,
                residual=self.use_res_connect, stride=stride)

        if self.stride == 1:
            o = run(1).reshape(N, H, Wp, self.cout_p)[:, :, :W, :self.cout]
        else:
            o = None
            if H % 2 == 0 and W % 2 == 0:
                try:
                    of = jax.block_until_ready(run(2))
                    o = of.reshape(N, H // 2, Wp // 2,
                                   self.cout_p)[:, :, :W // 2, :self.cout]
                except Exception:
                    o = None
            if o is None:
                # TODO(synk): odd-H/W stride-2 (or strided-load lowering failure)
                # falls back to full-res compute + wrapper-side subsample.
                of = run(1).reshape(N, H, Wp, self.cout_p)[:, :, :W, :self.cout]
                o = of[:, ::2, ::2, :]
        return jnp.transpose(o, (0, 3, 1, 2))                   # NHWC -> NCHW

    # Pure-JAX reference (lax convs, NCHW) for validation.
    def reference(self, x_nchw):
        dn = ("NCHW", "OIHW", "NCHW")
        h = x_nchw
        if self.expand:
            w = self.we_f32.T.reshape(self.hidden, self.cin, 1, 1)
            h = lax.conv_general_dilated(h, w, (1, 1), ((0, 0), (0, 0)),
                                         dimension_numbers=dn)
            h = jnp.clip(h + self.b1_f32.reshape(1, -1, 1, 1), 0.0, 6.0)
        wdw = jnp.transpose(self.wd9_f32.reshape(3, 3, self.hidden), (2, 0, 1))[:, None]
        h = lax.conv_general_dilated(h, wdw, (self.stride, self.stride),
                                     ((1, 1), (1, 1)), dimension_numbers=dn,
                                     feature_group_count=self.hidden)
        h = jnp.clip(h + self.b2_f32.reshape(1, -1, 1, 1), 0.0, 6.0)
        wpr = self.wp_f32.T.reshape(self.cout, self.hidden, 1, 1)
        h = lax.conv_general_dilated(h, wpr, (1, 1), ((0, 0), (0, 0)),
                                     dimension_numbers=dn)
        h = h + self.b3_f32.reshape(1, -1, 1, 1)
        if self.use_res_connect:
            h = h + x_nchw
        return h


if __name__ == "__main__":
    key = jax.random.PRNGKey(0)
    k_x, k_1, k_2, k_3 = jax.random.split(key, 4)

    x = jax.random.normal(k_x, (2, 8, 16, 16), jnp.float32)

    # Case 1: stride 1, expand ratio 2 -> residual path active.
    blk1 = InvertedResidualPallas(8, 8, 1, 2, k_1)
    y1 = jax.block_until_ready(blk1(x))
    r1 = jax.block_until_ready(blk1.reference(x))
    assert y1.shape == r1.shape == (2, 8, 16, 16)
    assert jnp.allclose(y1, r1, atol=2e-2, rtol=2e-2), float(jnp.max(jnp.abs(y1 - r1)))

    # Case 2: stride 2, expand ratio 3, channel change (in-kernel strided output).
    blk2 = InvertedResidualPallas(8, 16, 2, 3, k_2)
    y2 = jax.block_until_ready(blk2(x))
    r2 = jax.block_until_ready(blk2.reference(x))
    assert y2.shape == r2.shape == (2, 16, 8, 8)
    assert jnp.allclose(y2, r2, atol=2e-2, rtol=2e-2), float(jnp.max(jnp.abs(y2 - r2)))

    # Case 3: expand ratio 1 (no expansion conv), residual path active.
    blk3 = InvertedResidualPallas(8, 8, 1, 1, k_3)
    y3 = jax.block_until_ready(blk3(x))
    r3 = jax.block_until_ready(blk3.reference(x))
    assert y3.shape == r3.shape == (2, 8, 16, 16)
    assert jnp.allclose(y3, r3, atol=2e-2, rtol=2e-2), float(jnp.max(jnp.abs(y3 - r3)))

    print("KERNEL_OK")
</pallas_src>

<mosaic_0001>
module attributes {stable_mosaic.version = 11 : i64} {
  func.func @_fused_irb_kernel(%arg0: i32, %arg1: i32, %arg2: memref<1x256x128xf32, #tpu.memory_space<vmem>>, %arg3: memref<128x128xbf16, #tpu.memory_space<vmem>>, %arg4: memref<1x128xf32, #tpu.memory_space<vmem>>, %arg5: memref<9x128xf32, #tpu.memory_space<vmem>>, %arg6: memref<1x128xf32, #tpu.memory_space<vmem>>, %arg7: memref<128x128xbf16, #tpu.memory_space<vmem>>, %arg8: memref<1x128xf32, #tpu.memory_space<vmem>>, %arg9: memref<128x1xf32, #tpu.memory_space<vmem>>, %arg10: memref<128x1xf32, #tpu.memory_space<vmem>>, %arg11: memref<1x128x128xf32, #tpu.memory_space<vmem>>, %arg12: memref<176x128xf32, #tpu.memory_space<vmem>>) attributes {dimension_semantics = [#tpu.dimension_semantics<parallel>, #tpu.dimension_semantics<parallel>], iteration_bounds = array<i64: 2, 2>, scalar_prefetch = 0 : i64, scratch_operands = 1 : i64, tpu.core_type = #tpu.core_type<tc>, window_params = [{transform_indices = @transform_0, window_bounds = array<i64: 1, 256, 128>}, {pipeline_mode = #tpu.pipeline_mode<synchronous>, transform_indices = @transform_1, window_bounds = array<i64: 128, 128>}, {pipeline_mode = #tpu.pipeline_mode<synchronous>, transform_indices = @transform_2, window_bounds = array<i64: 1, 128>}, {pipeline_mode = #tpu.pipeline_mode<synchronous>, transform_indices = @transform_3, window_bounds = array<i64: 9, 128>}, {pipeline_mode = #tpu.pipeline_mode<synchronous>, transform_indices = @transform_4, window_bounds = array<i64: 1, 128>}, {pipeline_mode = #tpu.pipeline_mode<synchronous>, transform_indices = @transform_5, window_bounds = array<i64: 128, 128>}, {pipeline_mode = #tpu.pipeline_mode<synchronous>, transform_indices = @transform_6, window_bounds = array<i64: 1, 128>}, {pipeline_mode = #tpu.pipeline_mode<synchronous>, transform_indices = @transform_7, window_bounds = array<i64: 128, 1>}, {pipeline_mode = #tpu.pipeline_mode<synchronous>, transform_indices = @transform_8, window_bounds = array<i64: 128, 1>}, {transform_indices = @transform_9, window_bounds = array<i64: 1, 128, 128>}]} {
    %c8_i32 = arith.constant 8 : i32
    %0 = arith.muli %arg1, %c8_i32 : i32
    %cst = arith.constant 0.000000e+00 : f32
    %1 = vector.broadcast %cst : f32 to vector<8x128xf32>
    %c0 = arith.constant 0 : index
    %c0_0 = arith.constant 0 : index
    %2 = vector.load %arg12[%c0, %c0_0] : memref<176x128xf32, #tpu.memory_space<vmem>>, vector<8x128xf32>
    tpu.vector_store %arg12[%c0, %c0_0], %1 {strides = array<i32>} : memref<176x128xf32, #tpu.memory_space<vmem>>, vector<8x128xf32>,
    %c16_i32 = arith.constant 16 : i32
    %3 = arith.muli %0, %c16_i32 : i32
    %4 = tpu.assume_multiple %3, 16 : i32
    %c0_1 = arith.constant 0 : index
    %5 = arith.index_cast %4 : i32 to index
    %c0_2 = arith.constant 0 : index
    %6 = vector.load %arg2[%c0_1, %5, %c0_2] : memref<1x256x128xf32, #tpu.memory_space<vmem>>, vector<1x128x128xf32>
    %7 = vector.shape_cast %6 : vector<1x128x128xf32> to vector<128x128xf32>
    %8 = arith.truncf %7 : vector<128x128xf32> to vector<128x128xbf16>
    %c0_3 = arith.constant 0 : index
    %c0_4 = arith.constant 0 : index
    %9 = vector.load %arg3[%c0_3, %c0_4] : memref<128x128xbf16, #tpu.memory_space<vmem>>, vector<128x128xbf16>
    %cst_5 = arith.constant dense<0.000000e+00> : vector<128x128xf32>
    %10 = tpu.matmul %8, %9, %cst_5 {dimension_numbers = #tpu.dot_dimension_numbers<[1], [0], [0], [1], [0, 0, 1, 1], [], []>} : vector<128x128xbf16>, vector<128x128xbf16>, vector<128x128xf32> -> vector<128x128xf32>
    %c0_6 = arith.constant 0 : index
    %c0_7 = arith.constant 0 : index
    %11 = vector.load %arg4[%c0_6, %c0_7] : memref<1x128xf32, #tpu.memory_space<vmem>>, vector<1x128xf32>
    %12 = vector.broadcast %11 : vector<1x128xf32> to vector<128x128xf32>
    %13 = arith.addf %10, %12 : vector<128x128xf32>
    %cst_8 = arith.constant 0.000000e+00 : f32
    %cst_9 = arith.constant 6.000000e+00 : f32
    %14 = vector.broadcast %cst_8 : f32 to vector<128x128xf32>
    %15 = arith.maximumf %14, %13 : vector<128x128xf32>
    %16 = vector.broadcast %cst_9 : f32 to vector<128x128xf32>
    %17 = arith.minimumf %16, %15 : vector<128x128xf32>
    %c24 = arith.constant 24 : index
    %c0_10 = arith.constant 0 : index
    %18 = vector.load %arg12[%c24, %c0_10] : memref<176x128xf32, #tpu.memory_space<vmem>>, vector<128x128xf32>
    tpu.vector_store %arg12[%c24, %c0_10], %17 {strides = array<i32>} : memref<176x128xf32, #tpu.memory_space<vmem>>, vector<128x128xf32>,
    %c0_i32 = arith.constant 0 : i32
    %19 = arith.cmpi eq, %arg1, %c0_i32 : i32
    %20 = arith.extui %19 : i1 to i32
    %c0_i32_11 = arith.constant 0 : i32
    %21 = arith.cmpi ne, %20, %c0_i32_11 : i32
    scf.if %21 {
      %cst_61 = arith.constant 0.000000e+00 : f32
      %115 = vector.broadcast %cst_61 : f32 to vector<16x128xf32>
      %c8_62 = arith.constant 8 : index
      %c0_63 = arith.constant 0 : index
      %116 = vector.load %arg12[%c8_62, %c0_63] : memref<176x128xf32, #tpu.memory_space<vmem>>, vector<16x128xf32>
      tpu.vector_store %arg12[%c8_62, %c0_63], %115 {strides = array<i32>} : memref<176x128xf32, #tpu.memory_space<vmem>>, vector<16x128xf32>,
    } else {
    }
    %c0_i32_12 = arith.constant 0 : i32
    %22 = arith.cmpi sgt, %arg1, %c0_i32_12 : i32
    %23 = arith.extui %22 : i1 to i32
    %c0_i32_13 = arith.constant 0 : i32
    %24 = arith.cmpi ne, %23, %c0_i32_13 : i32
    scf.if %24 {
      %c1_i32_61 = arith.constant 1 : i32
      %115 = arith.subi %0, %c1_i32_61 : i32
      %c16_i32_62 = arith.constant 16 : i32
      %116 = arith.muli %115, %c16_i32_62 : i32
      %117 = tpu.assume_multiple %116, 16 : i32
      %c0_63 = arith.constant 0 : index
      %118 = arith.index_cast %117 : i32 to index
      %c0_64 = arith.constant 0 : index
      %119 = vector.load %arg2[%c0_63, %118, %c0_64] : memref<1x256x128xf32, #tpu.memory_space<vmem>>, vector<1x16x128xf32>
      %120 = vector.shape_cast %119 : vector<1x16x128xf32> to vector<16x128xf32>
      %121 = arith.truncf %120 : vector<16x128xf32> to vector<16x128xbf16>
      %c0_65 = arith.constant 0 : index
      %c0_66 = arith.constant 0 : index
      %122 = vector.load %arg3[%c0_65, %c0_66] : memref<128x128xbf16, #tpu.memory_space<vmem>>, vector<128x128xbf16>
      %cst_67 = arith.constant dense<0.000000e+00> : vector<16x128xf32>
      %123 = tpu.matmul %121, %122, %cst_67 {dimension_numbers = #tpu.dot_dimension_numbers<[1], [0], [0], [1], [0, 0, 1, 1], [], []>} : vector<16x128xbf16>, vector<128x128xbf16>, vector<16x128xf32> -> vector<16x128xf32>
      %c0_68 = arith.constant 0 : index
      %c0_69 = arith.constant 0 : index
      %124 = vector.load %arg4[%c0_68, %c0_69] : memref<1x128xf32, #tpu.memory_space<vmem>>, vector<1x128xf32>
      %125 = vector.broadcast %124 : vector<1x128xf32> to vector<16x128xf32>
      %126 = arith.addf %123, %125 : vector<16x128xf32>
      %cst_70 = arith.constant 0.000000e+00 : f32
      %cst_71 = arith.constant 6.000000e+00 : f32
      %127 = vector.broadcast %cst_70 : f32 to vector<16x128xf32>
      %128 = arith.maximumf %127, %126 : vector<16x128xf32>
      %129 = vector.broadcast %cst_71 : f32 to vector<16x128xf32>
      %130 = arith.minimumf %129, %128 : vector<16x128xf32>
      %c8_72 = arith.constant 8 : index
      %c0_73 = arith.constant 0 : index
      %131 = vector.load %arg12[%c8_72, %c0_73] : memref<176x128xf32, #tpu.memory_space<vmem>>, vector<16x128xf32>
      tpu.vector_store %arg12[%c8_72, %c0_73], %130 {strides = array<i32>} : memref<176x128xf32, #tpu.memory_space<vmem>>, vector<16x128xf32>,
    } else {
    }
    %cst_14 = arith.constant 0.000000e+00 : f32
    %25 = vector.broadcast %cst_14 : f32 to vector<8x128xf32>
    %c168 = arith.constant 168 : index
    %c0_15 = arith.constant 0 : index
    %26 = vector.load %arg12[%c168, %c0_15] : memref<176x128xf32, #tpu.memory_space<vmem>>, vector<8x128xf32>
    tpu.vector_store %arg12[%c168, %c0_15], %25 {strides = array<i32>} : memref<176x128xf32, #tpu.memory_space<vmem>>, vector<8x128xf32>,
    %c1_i32 = arith.constant 1 : i32
    %27 = arith.cmpi eq, %arg1, %c1_i32 : i32
    %28 = arith.extui %27 : i1 to i32
    %c0_i32_16 = arith.constant 0 : i32
    %29 = arith.cmpi ne, %28, %c0_i32_16 : i32
    scf.if %29 {
      %cst_61 = arith.constant 0.000000e+00 : f32
      %115 = vector.broadcast %cst_61 : f32 to vector<16x128xf32>
      %c152 = arith.constant 152 : index
      %c0_62 = arith.constant 0 : index
      %116 = vector.load %arg12[%c152, %c0_62] : memref<176x128xf32, #tpu.memory_space<vmem>>, vector<16x128xf32>
      tpu.vector_store %arg12[%c152, %c0_62], %115 {strides = array<i32>} : memref<176x128xf32, #tpu.memory_space<vmem>>, vector<16x128xf32>,
    } else {
    }
    %c1_i32_17 = arith.constant 1 : i32
    %30 = arith.cmpi slt, %arg1, %c1_i32_17 : i32
    %31 = arith.extui %30 : i1 to i32
    %c0_i32_18 = arith.constant 0 : i32
    %32 = arith.cmpi ne, %31, %c0_i32_18 : i32
    scf.if %32 {
      %c8_i32_61 = arith.constant 8 : i32
      %115 = arith.addi %0, %c8_i32_61 : i32
      %c16_i32_62 = arith.constant 16 : i32
      %116 = arith.muli %115, %c16_i32_62 : i32
      %117 = tpu.assume_multiple %116, 16 : i32
      %c0_63 = arith.constant 0 : index
      %118 = arith.index_cast %117 : i32 to index
      %c0_64 = arith.constant 0 : index
      %119 = vector.load %arg2[%c0_63, %118, %c0_64] : memref<1x256x128xf32, #tpu.memory_space<vmem>>, vector<1x16x128xf32>
      %120 = vector.shape_cast %119 : vector<1x16x128xf32> to vector<16x128xf32>
      %121 = arith.truncf %120 : vector<16x128xf32> to vector<16x128xbf16>
      %c0_65 = arith.constant 0 : index
      %c0_66 = arith.constant 0 : index
      %122 = vector.load %arg3[%c0_65, %c0_66] : memref<128x128xbf16, #tpu.memory_space<vmem>>, vector<128x128xbf16>
      %cst_67 = arith.constant dense<0.000000e+00> : vector<16x128xf32>
      %123 = tpu.matmul %121, %122, %cst_67 {dimension_numbers = #tpu.dot_dimension_numbers<[1], [0], [0], [1], [0, 0, 1, 1], [], []>} : vector<16x128xbf16>, vector<128x128xbf16>, vector<16x128xf32> -> vector<16x128xf32>
      %c0_68 = arith.constant 0 : index
      %c0_69 = arith.constant 0 : index
      %124 = vector.load %arg4[%c0_68, %c0_69] : memref<1x128xf32, #tpu.memory_space<vmem>>, vector<1x128xf32>
      %125 = vector.broadcast %124 : vector<1x128xf32> to vector<16x128xf32>
      %126 = arith.addf %123, %125 : vector<16x128xf32>
      %cst_70 = arith.constant 0.000000e+00 : f32
      %cst_71 = arith.constant 6.000000e+00 : f32
      %127 = vector.broadcast %cst_70 : f32 to vector<16x128xf32>
      %128 = arith.maximumf %127, %126 : vector<16x128xf32>
      %129 = vector.broadcast %cst_71 : f32 to vector<16x128xf32>
      %130 = arith.minimumf %129, %128 : vector<16x128xf32>
      %c152 = arith.constant 152 : index
      %c0_72 = arith.constant 0 : index
      %131 = vector.load %arg12[%c152, %c0_72] : memref<176x128xf32, #tpu.memory_space<vmem>>, vector<16x128xf32>
      tpu.vector_store %arg12[%c152, %c0_72], %130 {strides = array<i32>} : memref<176x128xf32, #tpu.memory_space<vmem>>, vector<16x128xf32>,
    } else {
    }
    %c0_19 = arith.constant 0 : index
    %c0_20 = arith.constant 0 : index
    %33 = vector.load %arg9[%c0_19, %c0_20] : memref<128x1xf32, #tpu.memory_space<vmem>>, vector<128x1xf32>
    %c0_21 = arith.constant 0 : index
    %c0_22 = arith.constant 0 : index
    %34 = vector.load %arg10[%c0_21, %c0_22] : memref<128x1xf32, #tpu.memory_space<vmem>>, vector<128x1xf32>
    %cst_23 = arith.constant 0.000000e+00 : f32
    %35 = vector.broadcast %cst_23 : f32 to vector<128x128xf32>
    %c7 = arith.constant 7 : index
    %c0_24 = arith.constant 0 : index
    %36 = vector.load %arg12[%c7, %c0_24] : memref<176x128xf32, #tpu.memory_space<vmem>>, vector<128x128xf32>
    %37 = vector.broadcast %33 : vector<128x1xf32> to vector<128x128xf32>
    %38 = arith.mulf %36, %37 : vector<128x128xf32>
    %c0_25 = arith.constant 0 : index
    %c0_26 = arith.constant 0 : index
    %39 = vector.load %arg5[%c0_25, %c0_26] : memref<9x128xf32, #tpu.memory_space<vmem>>, vector<1x128xf32>
    %40 = vector.broadcast %39 : vector<1x128xf32> to vector<128x128xf32>
    %41 = arith.mulf %38, %40 : vector<128x128xf32>
    %42 = arith.addf %35, %41 : vector<128x128xf32>
    %c8 = arith.constant 8 : index
    %c0_27 = arith.constant 0 : index
    %43 = vector.load %arg12[%c8, %c0_27] : memref<176x128xf32, #tpu.memory_space<vmem>>, vector<128x128xf32>
    %c1 = arith.constant 1 : index
    %c0_28 = arith.constant 0 : index
    %44 = vector.load %arg5[%c1, %c0_28] : memref<9x128xf32, #tpu.memory_space<vmem>>, vector<1x128xf32>
    %45 = vector.broadcast %44 : vector<1x128xf32> to vector<128x128xf32>
    %46 = arith.mulf %43, %45 : vector<128x128xf32>
    %47 = arith.addf %42, %46 : vector<128x128xf32>
    %c9 = arith.constant 9 : index
    %c0_29 = arith.constant 0 : index
    %48 = vector.load %arg12[%c9, %c0_29] : memref<176x128xf32, #tpu.memory_space<vmem>>, vector<128x128xf32>
    %49 = vector.broadcast %34 : vector<128x1xf32> to vector<128x128xf32>
    %50 = arith.mulf %48, %49 : vector<128x128xf32>
    %c2 = arith.constant 2 : index
    %c0_30 = arith.constant 0 : index
    %51 = vector.load %arg5[%c2, %c0_30] : memref<9x128xf32, #tpu.memory_space<vmem>>, vector<1x128xf32>
    %52 = vector.broadcast %51 : vector<1x128xf32> to vector<128x128xf32>
    %53 = arith.mulf %50, %52 : vector<128x128xf32>
    %54 = arith.addf %47, %53 : vector<128x128xf32>
    %c23 = arith.constant 23 : index
    %c0_31 = arith.constant 0 : index
    %55 = vector.load %arg12[%c23, %c0_31] : memref<176x128xf32, #tpu.memory_space<vmem>>, vector<128x128xf32>
    %56 = vector.broadcast %33 : vector<128x1xf32> to vector<128x128xf32>
    %57 = arith.mulf %55, %56 : vector<128x128xf32>
    %c3 = arith.constant 3 : index
    %c0_32 = arith.constant 0 : index
    %58 = vector.load %arg5[%c3, %c0_32] : memref<9x128xf32, #tpu.memory_space<vmem>>, vector<1x128xf32>
    %59 = vector.broadcast %58 : vector<1x128xf32> to vector<128x128xf32>
    %60 = arith.mulf %57, %59 : vector<128x128xf32>
    %61 = arith.addf %54, %60 : vector<128x128xf32>
    %c24_33 = arith.constant 24 : index
    %c0_34 = arith.constant 0 : index
    %62 = vector.load %arg12[%c24_33, %c0_34] : memref<176x128xf32, #tpu.memory_space<vmem>>, vector<128x128xf32>
    %c4 = arith.constant 4 : index
    %c0_35 = arith.constant 0 : index
    %63 = vector.load %arg5[%c4, %c0_35] : memref<9x128xf32, #tpu.memory_space<vmem>>, vector<1x128xf32>
    %64 = vector.broadcast %63 : vector<1x128xf32> to vector<128x128xf32>
    %65 = arith.mulf %62, %64 : vector<128x128xf32>
    %66 = arith.addf %61, %65 : vector<128x128xf32>
    %c25 = arith.constant 25 : index
    %c0_36 = arith.constant 0 : index
    %67 = vector.load %arg12[%c25, %c0_36] : memref<176x128xf32, #tpu.memory_space<vmem>>, vector<128x128xf32>
    %68 = vector.broadcast %34 : vector<128x1xf32> to vector<128x128xf32>
    %69 = arith.mulf %67, %68 : vector<128x128xf32>
    %c5 = arith.constant 5 : index
    %c0_37 = arith.constant 0 : index
    %70 = vector.load %arg5[%c5, %c0_37] : memref<9x128xf32, #tpu.memory_space<vmem>>, vector<1x128xf32>
    %71 = vector.broadcast %70 : vector<1x128xf32> to vector<128x128xf32>
    %72 = arith.mulf %69, %71 : vector<128x128xf32>
    %73 = arith.addf %66, %72 : vector<128x128xf32>
    %c39 = arith.constant 39 : index
    %c0_38 = arith.constant 0 : index
    %74 = vector.load %arg12[%c39, %c0_38] : memref<176x128xf32, #tpu.memory_space<vmem>>, vector<128x128xf32>
    %75 = vector.broadcast %33 : vector<128x1xf32> to vector<128x128xf32>
    %76 = arith.mulf %74, %75 : vector<128x128xf32>
    %c6 = arith.constant 6 : index
    %c0_39 = arith.constant 0 : index
    %77 = vector.load %arg5[%c6, %c0_39] : memref<9x128xf32, #tpu.memory_space<vmem>>, vector<1x128xf32>
    %78 = vector.broadcast %77 : vector<1x128xf32> to vector<128x128xf32>
    %79 = arith.mulf %76, %78 : vector<128x128xf32>
    %80 = arith.addf %73, %79 : vector<128x128xf32>
    %c40 = arith.constant 40 : index
    %c0_40 = arith.constant 0 : index
    %81 = vector.load %arg12[%c40, %c0_40] : memref<176x128xf32, #tpu.memory_space<vmem>>, vector<128x128xf32>
    %c7_41 = arith.constant 7 : index
    %c0_42 = arith.constant 0 : index
    %82 = vector.load %arg5[%c7_41, %c0_42] : memref<9x128xf32, #tpu.memory_space<vmem>>, vector<1x128xf32>
    %83 = vector.broadcast %82 : vector<1x128xf32> to vector<128x128xf32>
    %84 = arith.mulf %81, %83 : vector<128x128xf32>
    %85 = arith.addf %80, %84 : vector<128x128xf32>
    %c41 = arith.constant 41 : index
    %c0_43 = arith.constant 0 : index
    %86 = vector.load %arg12[%c41, %c0_43] : memref<176x128xf32, #tpu.memory_space<vmem>>, vector<128x128xf32>
    %87 = vector.broadcast %34 : vector<128x1xf32> to vector<128x128xf32>
    %88 = arith.mulf %86, %87 : vector<128x128xf32>
    %c8_44 = arith.constant 8 : index
    %c0_45 = arith.constant 0 : index
    %89 = vector.load %arg5[%c8_44, %c0_45] : memref<9x128xf32, #tpu.memory_space<vmem>>, vector<1x128xf32>
    %90 = vector.broadcast %89 : vector<1x128xf32> to vector<128x128xf32>
    %91 = arith.mulf %88, %90 : vector<128x128xf32>
    %92 = arith.addf %85, %91 : vector<128x128xf32>
    %c0_46 = arith.constant 0 : index
    %c0_47 = arith.constant 0 : index
    %93 = vector.load %arg6[%c0_46, %c0_47] : memref<1x128xf32, #tpu.memory_space<vmem>>, vector<1x128xf32>
    %94 = vector.broadcast %93 : vector<1x128xf32> to vector<128x128xf32>
    %95 = arith.addf %92, %94 : vector<128x128xf32>
    %cst_48 = arith.constant 0.000000e+00 : f32
    %cst_49 = arith.constant 6.000000e+00 : f32
    %96 = vector.broadcast %cst_48 : f32 to vector<128x128xf32>
    %97 = arith.maximumf %96, %95 : vector<128x128xf32>
    %98 = vector.broadcast %cst_49 : f32 to vector<128x128xf32>
    %99 = arith.minimumf %98, %97 : vector<128x128xf32>
    %100 = arith.truncf %99 : vector<128x128xf32> to vector<128x128xbf16>
    %c0_50 = arith.constant 0 : index
    %c0_51 = arith.constant 0 : index
    %101 = vector.load %arg7[%c0_50, %c0_51] : memref<128x128xbf16, #tpu.memory_space<vmem>>, vector<128x128xbf16>
    %cst_52 = arith.constant dense<0.000000e+00> : vector<128x128xf32>
    %102 = tpu.matmul %100, %101, %cst_52 {dimension_numbers = #tpu.dot_dimension_numbers<[1], [0], [0], [1], [0, 0, 1, 1], [], []>} : vector<128x128xbf16>, vector<128x128xbf16>, vector<128x128xf32> -> vector<128x128xf32>
    %c0_53 = arith.constant 0 : index
    %c0_54 = arith.constant 0 : index
    %103 = vector.load %arg8[%c0_53, %c0_54] : memref<1x128xf32, #tpu.memory_space<vmem>>, vector<1x128xf32>
    %104 = vector.broadcast %103 : vector<1x128xf32> to vector<128x128xf32>
    %105 = arith.addf %102, %104 : vector<128x128xf32>
    %c16_i32_55 = arith.constant 16 : i32
    %106 = arith.muli %0, %c16_i32_55 : i32
    %107 = tpu.assume_multiple %106, 16 : i32
    %c0_56 = arith.constant 0 : index
    %108 = arith.index_cast %107 : i32 to index
    %c0_57 = arith.constant 0 : index
    %109 = vector.load %arg2[%c0_56, %108, %c0_57] : memref<1x256x128xf32, #tpu.memory_space<vmem>>, vector<1x128x128xf32>
    %110 = vector.shape_cast %109 : vector<1x128x128xf32> to vector<128x128xf32>
    %111 = arith.addf %105, %110 : vector<128x128xf32>
    %c0_58 = arith.constant 0 : index
    %c0_59 = arith.constant 0 : index
    %c0_60 = arith.constant 0 : index
    %112 = vector.load %arg11[%c0_58, %c0_59, %c0_60] : memref<1x128x128xf32, #tpu.memory_space<vmem>>, vector<1x128x128xf32>
    %113 = vector.shape_cast %112 : vector<1x128x128xf32> to vector<128x128xf32>
    %114 = vector.shape_cast %111 : vector<128x128xf32> to vector<1x128x128xf32>
    tpu.vector_store %arg11[%c0_58, %c0_59, %c0_60], %114 {strides = array<i32>} : memref<1x128x128xf32, #tpu.memory_space<vmem>>, vector<1x128x128xf32>,
    return
  }
  func.func @transform_0(%arg0: i32, %arg1: i32) -> (i32, i32, i32) {
    %c0_i32 = arith.constant 0 : i32
    %c0_i32_0 = arith.constant 0 : i32
    %c0_i32_1 = arith.constant 0 : i32
    return %arg0, %c0_i32, %c0_i32_0 : i32, i32, i32
  }
  func.func @transform_1(%arg0: i32, %arg1: i32) -> (i32, i32) {
    %c0_i32 = arith.constant 0 : i32
    %c0_i32_0 = arith.constant 0 : i32
    %c0_i32_1 = arith.constant 0 : i32
    return %c0_i32, %c0_i32_0 : i32, i32
  }
  func.func @transform_2(%arg0: i32, %arg1: i32) -> (i32, i32) {
    %c0_i32 = arith.constant 0 : i32
    %c0_i32_0 = arith.constant 0 : i32
    %c0_i32_1 = arith.constant 0 : i32
    return %c0_i32, %c0_i32_0 : i32, i32
  }
  func.func @transform_3(%arg0: i32, %arg1: i32) -> (i32, i32) {
    %c0_i32 = arith.constant 0 : i32
    %c0_i32_0 = arith.constant 0 : i32
    %c0_i32_1 = arith.constant 0 : i32
    return %c0_i32, %c0_i32_0 : i32, i32
  }
  func.func @transform_4(%arg0: i32, %arg1: i32) -> (i32, i32) {
    %c0_i32 = arith.constant 0 : i32
    %c0_i32_0 = arith.constant 0 : i32
    %c0_i32_1 = arith.constant 0 : i32
    return %c0_i32, %c0_i32_0 : i32, i32
  }
  func.func @transform_5(%arg0: i32, %arg1: i32) -> (i32, i32) {
    %c0_i32 = arith.constant 0 : i32
    %c0_i32_0 = arith.constant 0 : i32
    %c0_i32_1 = arith.constant 0 : i32
    return %c0_i32, %c0_i32_0 : i32, i32
  }
  func.func @transform_6(%arg0: i32, %arg1: i32) -> (i32, i32) {
    %c0_i32 = arith.constant 0 : i32
    %c0_i32_0 = arith.constant 0 : i32
    %c0_i32_1 = arith.constant 0 : i32
    return %c0_i32, %c0_i32_0 : i32, i32
  }
  func.func @transform_7(%arg0: i32, %arg1: i32) -> (i32, i32) {
    %c0_i32 = arith.constant 0 : i32
    %c0_i32_0 = arith.constant 0 : i32
    %c0_i32_1 = arith.constant 0 : i32
    return %c0_i32, %c0_i32_0 : i32, i32
  }
  func.func @transform_8(%arg0: i32, %arg1: i32) -> (i32, i32) {
    %c0_i32 = arith.constant 0 : i32
    %c0_i32_0 = arith.constant 0 : i32
    %c0_i32_1 = arith.constant 0 : i32
    return %c0_i32, %c0_i32_0 : i32, i32
  }
  func.func @transform_9(%arg0: i32, %arg1: i32) -> (i32, i32, i32) {
    %c0_i32 = arith.constant 0 : i32
    %c0_i32_0 = arith.constant 0 : i32
    return %arg0, %arg1, %c0_i32 : i32, i32, i32
  }
}

</mosaic_0001>

<llo_original>
// kernel: tpu_custom_call.1
$region0: #{tpu_custom_call.1}
  #allocation0 [shape = 'u32[]', space=smem, size = 0x4, offset = 0x4, fixed_abs, tag = 'smem constant byte address 0x4 - core index']
  #allocation1 [shape = 'u32[144,128]{1,0:T(1,128)}', space=vmem, size = 0x12000, scoped, tag = 'internal scratch']
  #allocation2 [shape = 'f32[176,128]{1,0:T(8,128)}', space=vmem, size = 0x16000, scoped, tag = 'scratch operand']
  %s0 = inlined_call_operand.hbm [shape: f32[2,256,128], index: 0, kind: input, shape index: {}]
  %s1 = inlined_call_operand.vmem [shape: bf16[128,128], index: 1, kind: input, shape index: {}]
  %s2 = inlined_call_operand.vmem [shape: f32[1,128], index: 2, kind: input, shape index: {}]
  %s3 = inlined_call_operand.vmem [shape: f32[9,128], index: 3, kind: input, shape index: {}]
  %s4 = inlined_call_operand.vmem [shape: f32[1,128], index: 4, kind: input, shape index: {}]
  %s5 = inlined_call_operand.vmem [shape: bf16[128,128], index: 5, kind: input, shape index: {}]
  %s6 = inlined_call_operand.vmem [shape: f32[1,128], index: 6, kind: input, shape index: {}]
  %s7 = inlined_call_operand.vmem [shape: f32[128,1], index: 7, kind: input, shape index: {}]
  %s8 = inlined_call_operand.vmem [shape: f32[128,1], index: 8, kind: input, shape index: {}]
  %s9 = inlined_call_operand.hbm [shape: f32[2,256,128], index: 9, kind: output, shape index: {}]
  %s10 = sld [smem:[#allocation0]]
  $region89: #{tpu_custom_call.1} parent=0
    _
  %s12 = ssub.s32 1, %s10
  %s13 = scalar_select 0, %s12, %s10
  $region1: #{tpu_custom_call.1} parent=0
    #allocation3 [shape = 'u8[262144]{0}', space=vmem, size = 0x40000, scoped, tag = 'input window, operand 0']
    #allocation4 [shape = 's32[2]{0}', space=sflag, size = 0x8, scoped, tag = 'scoped memory for tpu_custom_call.1']
    #allocation5 [shape = 's32[2]{0}', space=sflag, size = 0x8, scoped, tag = 'scoped memory for tpu_custom_call.1']
    #allocation6 [shape = 'u8[131072]{0}', space=vmem, size = 0x20000, scoped, tag = 'output window, operand 0']
    %14 = vsyncpa [#allocation4], 0
    %s15 = scalar_lea.sflag [#allocation4], 1
    %16 = vsyncpa %s15, 0
    %17 = vsyncpa [#allocation5], 0
    %s18 = scalar_lea.sflag [#allocation5], 1
    %19 = vsyncpa %s18, 0
    loop: start=0, step=1, limit=6
    $region2: #{tpu_custom_call.1} parent=1 // loop_pre_header
      _
    $region3: #{tpu_custom_call.1} parent=1 // loop_header
      %s21 = sphi 0, %s25
      %p22 = scmp.ge.s32.totalorder %s21, 6
      %s28 = sphi 0, %s40
      %s29 = sphi 0, %s36
      %s30 = sphi 0, %s28
      %s31 = sphi 0, %s29
      %s32 = sphi 0, %s30
      %s33 = sphi 0, %s31
      %s43 = sphi 0, %s45
      %s46 = sphi 0, %s43
      %s47 = sphi 0, %s46
      %s63 = sphi 0, %s47
      %s67 = sphi 0, %s67
      %s69 = sphi 0, %s67
      %s70 = sphi 0, %s69
      %s84 = sphi 0, %s70
      %s88 = sphi 0, %s88
      %s90 = sphi 0, %s88
      %s91 = sphi 0, %s90
      %s105 = sphi 0, %s91
      %s109 = sphi 0, %s109
      %s111 = sphi 0, %s109
      %s112 = sphi 0, %s111
      %s126 = sphi 0, %s112
      %s130 = sphi 0, %s130
      %s132 = sphi 0, %s130
      %s133 = sphi 0, %s132
      %s147 = sphi 0, %s133
      %s151 = sphi 0, %s151
      %s153 = sphi 0, %s151
      %s154 = sphi 0, %s153
      %s168 = sphi 0, %s154
      %s172 = sphi 0, %s172
      %s174 = sphi 0, %s172
      %s175 = sphi 0, %s174
      %s189 = sphi 0, %s175
      %s193 = sphi 0, %s193
      %s195 = sphi 0, %s193
      %s196 = sphi 0, %s195
      %s210 = sphi 0, %s196
      %s214 = sphi 0, %s214
      %s216 = sphi 0, %s214
      %s217 = sphi 0, %s216
      %s231 = sphi 0, %s217
      %s239 = sphi 0, %s241
      %s242 = sphi 0, %s239
      %s243 = sphi 0, %s242
      %s259 = sphi 0, %s243
    $region4: #{tpu_custom_call.1} parent=1 // loop_header_branch
      %24 = sbr.rel (%p22) target = $region8
    $region5: #{tpu_custom_call.1} parent=1 // loop_body
      %s26 = ssub.s32 %s21, 1
      %s27 = ssub.s32 %s21, 2
      %s34 = sadd.s32 1, %s29
      %p35 = scmp.ge.s32.totalorder %s34, 2
      %s36 = scalar_select %p35, 0, %s34
      %s37 = sadd.s32 1, %s28
      %s38 = scalar_select %p35, %s37, %s28
      %p39 = scmp.ge.s32.totalorder %s38, 2
      %s40 = scalar_select %p39, 0, %s38
      %s41 = ssub.s32 %s28, %s40
      %p42 = scmp.eq.s32.totalorder %s41, 0
      %s44 = sadd.s32 %s43, 1
      %s45 = scalar_select %p42, %s43, %s44
      %p48 = pneg %p42
      %p49 = scmp.eq.s32.totalorder %s21, 3
      %p50 = por %p48, %p49
      %p51 = scmp.ne.s32.totalorder %s43, %s46
      %p52 = scmp.eq.s32.totalorder %s21, 0
      %p53 = por %p51, %p52
      %p54 = scmp.ne.s32.totalorder %s43, %s46
      %p55 = scmp.eq.s32.totalorder %s26, 3
      %p56 = por %p54, %p55
      %p57 = scmp.ne.s32.totalorder %s46, %s47
      %p58 = scmp.eq.s32.totalorder %s26, 0
      %p59 = por %p57, %p58
      %p60 = scmp.ne.s32.totalorder %s46, %s47
      %p61 = scmp.eq.s32.totalorder %s27, 3
      %p62 = por %p60, %p61
      %p64 = scmp.ne.s32.totalorder %s47, %s63
      %p65 = scmp.eq.s32.totalorder %s27, 0
      %p66 = por %p64, %p65
      %s68 = sadd.s32 %s67, 1
      %p71 = scmp.eq.s32.totalorder %s21, 3
      %p72 = scmp.ne.s32.totalorder %s67, %s69
      %p73 = scmp.eq.s32.totalorder %s21, 0
      %p74 = por %p72, %p73
      %p75 = scmp.ne.s32.totalorder %s67, %s69
      %p76 = scmp.eq.s32.totalorder %s26, 3
      %p77 = por %p75, %p76
      %p78 = scmp.ne.s32.totalorder %s69, %s70
      %p79 = scmp.eq.s32.totalorder %s26, 0
      %p80 = por %p78, %p79
      %p81 = scmp.ne.s32.totalorder %s69, %s70
      %p82 = scmp.eq.s32.totalorder %s27, 3
      %p83 = por %p81, %p82
      %p85 = scmp.ne.s32.totalorder %s70, %s84
      %p86 = scmp.eq.s32.totalorder %s27, 0
      %p87 = por %p85, %p86
      %s89 = sadd.s32 %s88, 1
      %p92 = scmp.eq.s32.totalorder %s21, 3
      %p93 = scmp.ne.s32.totalorder %s88, %s90
      %p94 = scmp.eq.s32.totalorder %s21, 0
      %p95 = por %p93, %p94
      %p96 = scmp.ne.s32.totalorder %s88, %s90
      %p97 = scmp.eq.s32.totalorder %s26, 3
      %p98 = por %p96, %p97
      %p99 = scmp.ne.s32.totalorder %s90, %s91
      %p100 = scmp.eq.s32.totalorder %s26, 0
      %p101 = por %p99, %p100
      %p102 = scmp.ne.s32.totalorder %s90, %s91
      %p103 = scmp.eq.s32.totalorder %s27, 3
      %p104 = por %p102, %p103
      %p106 = scmp.ne.s32.totalorder %s91, %s105
      %p107 = scmp.eq.s32.totalorder %s27, 0
      %p108 = por %p106, %p107
      %s110 = sadd.s32 %s109, 1
      %p113 = scmp.eq.s32.totalorder %s21, 3
      %p114 = scmp.ne.s32.totalorder %s109, %s111
      %p115 = scmp.eq.s32.totalorder %s21, 0
      %p116 = por %p114, %p115
      %p117 = scmp.ne.s32.totalorder %s109, %s111
      %p118 = scmp.eq.s32.totalorder %s26, 3
      %p119 = por %p117, %p118
      %p120 = scmp.ne.s32.totalorder %s111, %s112
      %p121 = scmp.eq.s32.totalorder %s26, 0
      %p122 = por %p120, %p121
      %p123 = scmp.ne.s32.totalorder %s111, %s112
      %p124 = scmp.eq.s32.totalorder %s27, 3
      %p125 = por %p123, %p124
      %p127 = scmp.ne.s32.totalorder %s112, %s126
      %p128 = scmp.eq.s32.totalorder %s27, 0
      %p129 = por %p127, %p128
      %s131 = sadd.s32 %s130, 1
      %p134 = scmp.eq.s32.totalorder %s21, 3
      %p135 = scmp.ne.s32.totalorder %s130, %s132
      %p136 = scmp.eq.s32.totalorder %s21, 0
      %p137 = por %p135, %p136
      %p138 = scmp.ne.s32.totalorder %s130, %s132
      %p139 = scmp.eq.s32.totalorder %s26, 3
      %p140 = por %p138, %p139
      %p141 = scmp.ne.s32.totalorder %s132, %s133
      %p142 = scmp.eq.s32.totalorder %s26, 0
      %p143 = por %p141, %p142
      %p144 = scmp.ne.s32.totalorder %s132, %s133
      %p145 = scmp.eq.s32.totalorder %s27, 3
      %p146 = por %p144, %p145
      %p148 = scmp.ne.s32.totalorder %s133, %s147
      %p149 = scmp.eq.s32.totalorder %s27, 0
      %p150 = por %p148, %p149
      %s152 = sadd.s32 %s151, 1
      %p155 = scmp.eq.s32.totalorder %s21, 3
      %p156 = scmp.ne.s32.totalorder %s151, %s153
      %p157 = scmp.eq.s32.totalorder %s21, 0
      %p158 = por %p156, %p157
      %p159 = scmp.ne.s32.totalorder %s151, %s153
      %p160 = scmp.eq.s32.totalorder %s26, 3
      %p161 = por %p159, %p160
      %p162 = scmp.ne.s32.totalorder %s153, %s154
      %p163 = scmp.eq.s32.totalorder %s26, 0
      %p164 = por %p162, %p163
      %p165 = scmp.ne.s32.totalorder %s153, %s154
      %p166 = scmp.eq.s32.totalorder %s27, 3
      %p167 = por %p165, %p166
      %p169 = scmp.ne.s32.totalorder %s154, %s168
      %p170 = scmp.eq.s32.totalorder %s27, 0
      %p171 = por %p169, %p170
      %s173 = sadd.s32 %s172, 1
      %p176 = scmp.eq.s32.totalorder %s21, 3
      %p177 = scmp.ne.s32.totalorder %s172, %s174
      %p178 = scmp.eq.s32.totalorder %s21, 0
      %p179 = por %p177, %p178
      %p180 = scmp.ne.s32.totalorder %s172, %s174
      %p181 = scmp.eq.s32.totalorder %s26, 3
      %p182 = por %p180, %p181
      %p183 = scmp.ne.s32.totalorder %s174, %s175
      %p184 = scmp.eq.s32.totalorder %s26, 0
      %p185 = por %p183, %p184
      %p186 = scmp.ne.s32.totalorder %s174, %s175
      %p187 = scmp.eq.s32.totalorder %s27, 3
      %p188 = por %p186, %p187
      %p190 = scmp.ne.s32.totalorder %s175, %s189
      %p191 = scmp.eq.s32.totalorder %s27, 0
      %p192 = por %p190, %p191
      %s194 = sadd.s32 %s193, 1
      %p197 = scmp.eq.s32.totalorder %s21, 3
      %p198 = scmp.ne.s32.totalorder %s193, %s195
      %p199 = scmp.eq.s32.totalorder %s21, 0
      %p200 = por %p198, %p199
      %p201 = scmp.ne.s32.totalorder %s193, %s195
      %p202 = scmp.eq.s32.totalorder %s26, 3
      %p203 = por %p201, %p202
      %p204 = scmp.ne.s32.totalorder %s195, %s196
      %p205 = scmp.eq.s32.totalorder %s26, 0
      %p206 = por %p204, %p205
      %p207 = scmp.ne.s32.totalorder %s195, %s196
      %p208 = scmp.eq.s32.totalorder %s27, 3
      %p209 = por %p207, %p208
      %p211 = scmp.ne.s32.totalorder %s196, %s210
      %p212 = scmp.eq.s32.totalorder %s27, 0
      %p213 = por %p211, %p212
      %s215 = sadd.s32 %s214, 1
      %p218 = scmp.eq.s32.totalorder %s21, 3
      %p219 = scmp.ne.s32.totalorder %s214, %s216
      %p220 = scmp.eq.s32.totalorder %s21, 0
      %p221 = por %p219, %p220
      %p222 = scmp.ne.s32.totalorder %s214, %s216
      %p223 = scmp.eq.s32.totalorder %s26, 3
      %p224 = por %p222, %p223
      %p225 = scmp.ne.s32.totalorder %s216, %s217
      %p226 = scmp.eq.s32.totalorder %s26, 0
      %p227 = por %p225, %p226
      %p228 = scmp.ne.s32.totalorder %s216, %s217
      %p229 = scmp.eq.s32.totalorder %s27, 3
      %p230 = por %p228, %p229
      %p232 = scmp.ne.s32.totalorder %s217, %s231
      %p233 = scmp.eq.s32.totalorder %s27, 0
      %p234 = por %p232, %p233
      %s235 = ssub.s32 %s28, %s40
      %s236 = ssub.s32 %s29, %s36
      %s237 = sor.u32 %s235, %s236
      %p238 = scmp.eq.s32.totalorder %s237, 0
      %s240 = sadd.s32 %s239, 1
      %s241 = scalar_select %p238, %s239, %s240
      %p244 = pneg %p238
      %p245 = scmp.eq.s32.totalorder %s21, 3
      %p246 = por %p244, %p245
      %p247 = scmp.ne.s32.totalorder %s239, %s242
      %p248 = scmp.eq.s32.totalorder %s21, 0
      %p249 = por %p247, %p248
      %p250 = scmp.ne.s32.totalorder %s239, %s242
      %p251 = scmp.eq.s32.totalorder %s26, 3
      %p252 = por %p250, %p251
      %p253 = scmp.ne.s32.totalorder %s242, %s243
      %p254 = scmp.eq.s32.totalorder %s26, 0
      %p255 = por %p253, %p254
      %p256 = scmp.ne.s32.totalorder %s242, %s243
      %p257 = scmp.eq.s32.totalorder %s27, 3
      %p258 = por %p256, %p257
      %p260 = scmp.ne.s32.totalorder %s243, %s259
      %p261 = scmp.eq.s32.totalorder %s27, 0
      %p262 = por %p260, %p261
      %p263 = scmp.le.s32.totalorder 1, %s21
      %p264 = scmp.lt.s32.totalorder %s21, 5
      %p265 = pnand %p263, %p264
      %p266 = pneg %p265
      // Predicated region
      $region9: #{tpu_custom_call.1} parent=5 // pred_check
        _
      $region10: #{tpu_custom_call.1} parent=5 // pred_check_branch
        %268 = sbr.rel (%p265) target = $region12
      $region11: #{tpu_custom_call.1} parent=5 // pred_region
        %s269 = ssub.s32 %s21, 1
        // Predicated region
        $region13: #{tpu_custom_call.1} parent=11 // pred_check
          %p270 = pneg %p80
        $region14: #{tpu_custom_call.1} parent=11 // pred_check_branch
          %272 = sbr.rel (%p270) target = $region16
        $region15: #{tpu_custom_call.1} parent=11 // pred_region
          _
        $region16: #{tpu_custom_call.1} parent=11 // pred_fallthru
          _
        // Predicated region
        $region17: #{tpu_custom_call.1} parent=11 // pred_check
          %p273 = pneg %p101
        $region18: #{tpu_custom_call.1} parent=11 // pred_check_branch
          %275 = sbr.rel (%p273) target = $region20
        $region19: #{tpu_custom_call.1} parent=11 // pred_region
          _
        $region20: #{tpu_custom_call.1} parent=11 // pred_fallthru
          _
        // Predicated region
        $region21: #{tpu_custom_call.1} parent=11 // pred_check
          %p276 = pneg %p122
        $region22: #{tpu_custom_call.1} parent=11 // pred_check_branch
          %278 = sbr.rel (%p276) target = $region24
        $region23: #{tpu_custom_call.1} parent=11 // pred_region
          _
        $region24: #{tpu_custom_call.1} parent=11 // pred_fallthru
          _
        // Predicated region
        $region25: #{tpu_custom_call.1} parent=11 // pred_check
          %p279 = pneg %p143
        $region26: #{tpu_custom_call.1} parent=11 // pred_check_branch
          %281 = sbr.rel (%p279) target = $region28
        $region27: #{tpu_custom_call.1} parent=11 // pred_region
          _
        $region28: #{tpu_custom_call.1} parent=11 // pred_fallthru
          _
        // Predicated region
        $region29: #{tpu_custom_call.1} parent=11 // pred_check
          %p282 = pneg %p164
        $region30: #{tpu_custom_call.1} parent=11 // pred_check_branch
          %284 = sbr.rel (%p282) target = $region32
        $region31: #{tpu_custom_call.1} parent=11 // pred_region
          _
        $region32: #{tpu_custom_call.1} parent=11 // pred_fallthru
          _
        // Predicated region
        $region33: #{tpu_custom_call.1} parent=11 // pred_check
          %p285 = pneg %p185
        $region34: #{tpu_custom_call.1} parent=11 // pred_check_branch
          %287 = sbr.rel (%p285) target = $region36
        $region35: #{tpu_custom_call.1} parent=11 // pred_region
          _
        $region36: #{tpu_custom_call.1} parent=11 // pred_fallthru
          _
        // Predicated region
        $region37: #{tpu_custom_call.1} parent=11 // pred_check
          %p288 = pneg %p206
        $region38: #{tpu_custom_call.1} parent=11 // pred_check_branch
          %290 = sbr.rel (%p288) target = $region40
        $region39: #{tpu_custom_call.1} parent=11 // pred_region
          _
        $region40: #{tpu_custom_call.1} parent=11 // pred_fallthru
          _
        // Predicated region
        $region41: #{tpu_custom_call.1} parent=11 // pred_check
          %p291 = pneg %p227
        $region42: #{tpu_custom_call.1} parent=11 // pred_check_branch
          %293 = sbr.rel (%p291) target = $region44
        $region43: #{tpu_custom_call.1} parent=11 // pred_region
          _
        $region44: #{tpu_custom_call.1} parent=11 // pred_fallthru
          _
      $region12: #{tpu_custom_call.1} parent=5 // pred_fallthru
        _
      %p294 = scmp.lt.s32.totalorder %s21, 4
      // Predicated region
      $region45: #{tpu_custom_call.1} parent=5 // pred_check
        %p295 = pneg %p294
      $region46: #{tpu_custom_call.1} parent=5 // pred_check_branch
        %297 = sbr.rel (%p295) target = $region48
      $region47: #{tpu_custom_call.1} parent=5 // pred_region
        // Predicated region
        $region49: #{tpu_custom_call.1} parent=47 // pred_check
          %p298 = pneg %p53
        $region50: #{tpu_custom_call.1} parent=47 // pred_check_branch
          %300 = sbr.rel (%p298) target = $region52
        $region51: #{tpu_custom_call.1} parent=47 // pred_region
          %s301 = sand.u32 %s43, 1
          %s302 = scalar_lea.sflag [#allocation4], %s301
          %s303 = sand.u32 %s43, 1
          %s304 = smul.addr %s303, 256
          %s305 = scalar_lea.vmem [#allocation3], %s304
          %s307 = ssub.s32 4096, 4096
          %308 = vsyncadd %s302, %s307
          %s309 = smul.addr %s28, 32
          %s310 = smul.addr %s309, 128
          %s311 = scalar_lea.hbm %s0, %s310
          %s312 = sshll.u32 %s305, 4
          %s313 = int_to_ptr.vmem [resolvable:$true] %s312
          %318 = dma.hbm_to_vmem [thread:$0]  %s311, 4096, %s313, %s302, 128, 128, 8
        $region52: #{tpu_custom_call.1} parent=47 // pred_fallthru
          _
      $region48: #{tpu_custom_call.1} parent=5 // pred_fallthru
        _
      %p319 = scmp.le.s32.totalorder 1, %s21
      %p320 = scmp.lt.s32.totalorder %s21, 5
      %p321 = pnand %p319, %p320
      %p322 = pneg %p321
      // Predicated region
      $region53: #{tpu_custom_call.1} parent=5 // pred_check
        _
      $region54: #{tpu_custom_call.1} parent=5 // pred_check_branch
        %324 = sbr.rel (%p321) target = $region56
      $region55: #{tpu_custom_call.1} parent=5 // pred_region
        %s325 = ssub.s32 %s21, 1
        %s326 = sand.u32 %s46, 1
        %s327 = scalar_lea.sflag [#allocation4], %s326
        %s328 = sand.u32 %s46, 1
        %s329 = smul.addr %s328, 256
        %s330 = scalar_lea.vmem [#allocation3], %s329
        // Predicated region
        $region57: #{tpu_custom_call.1} parent=55 // pred_check
          %p331 = pneg %p59
        $region58: #{tpu_custom_call.1} parent=55 // pred_check_branch
          %333 = sbr.rel (%p331) target = $region60
        $region59: #{tpu_custom_call.1} parent=55 // pred_region
          %334 = dma.done %s327, 4096
        $region60: #{tpu_custom_call.1} parent=55 // pred_fallthru
          _
        %s335 = sand.u32 %s46, 1
        %s336 = scalar_lea.sflag [#allocation4], %s335
        %s337 = sand.u32 %s46, 1
        %s338 = smul.addr %s337, 256
        %s339 = scalar_lea.vmem [#allocation3], %s338
        %p340 = pneg %p59
        %p341 = pneg %p56
        %p342 = pneg %p80
        %p343 = pneg %p77
        %p344 = pneg %p101
        %p345 = pneg %p98
        %p346 = pneg %p122
        %p347 = pneg %p119
        %p348 = pneg %p143
        %p349 = pneg %p140
        %p350 = pneg %p164
        %p351 = pneg %p161
        %p352 = pneg %p185
        %p353 = pneg %p182
        %p354 = pneg %p206
        %p355 = pneg %p203
        %p356 = pneg %p227
        %p357 = pneg %p224
        %p358 = pneg %p255
        %p359 = pneg %p252
        %s360 = sand.u32 %s242, 1
        %s361 = scalar_lea.sflag [#allocation5], %s360
        %s362 = sand.u32 %s242, 1
        %s363 = smul.addr %s362, 128
        %s364 = scalar_lea.vmem [#allocation6], %s363
        %s365 = smul.u32 16, %s31
        %s367 = smul.u32 %s31, 8
        %368 = vst [vmem:[#allocation2] sm:$0xff] 0.0
        %s369 = smul.u32 %s31, 128
        %s370 = scalar_lea.vmem %s330, %s369 [#allocation3]
        %v371 = vld [vmem:[%s370] sm:$0xff]
        %v372 = vld [vmem:[%s370 + $0x8] sm:$0xff]
        %v373 = vld [vmem:[%s370 + $0x10] sm:$0xff]
        %v374 = vld [vmem:[%s370 + $0x18] sm:$0xff]
        %v375 = vld [vmem:[%s370 + $0x20] sm:$0xff]
        %v376 = vld [vmem:[%s370 + $0x28] sm:$0xff]
        %v377 = vld [vmem:[%s370 + $0x30] sm:$0xff]
        %v378 = vld [vmem:[%s370 + $0x38] sm:$0xff]
        %v379 = vld [vmem:[%s370 + $0x40] sm:$0xff]
        %v380 = vld [vmem:[%s370 + $0x48] sm:$0xff]
        %v381 = vld [vmem:[%s370 + $0x50] sm:$0xff]
        %v382 = vld [vmem:[%s370 + $0x58] sm:$0xff]
        %v383 = vld [vmem:[%s370 + $0x60] sm:$0xff]
        %v384 = vld [vmem:[%s370 + $0x68] sm:$0xff]
        %v385 = vld [vmem:[%s370 + $0x70] sm:$0xff]
        %v386 = vld [vmem:[%s370 + $0x78] sm:$0xff]
        %v387 = vpack.c.bf16 %v372, %v371
        %v388 = vpack.c.bf16 %v374, %v373
        %v389 = vpack.c.bf16 %v376, %v375
        %v390 = vpack.c.bf16 %v378, %v377
        %v391 = vpack.c.bf16 %v380, %v379
        %v392 = vpack.c.bf16 %v382, %v381
        %v393 = vpack.c.bf16 %v384, %v383
        %v394 = vpack.c.bf16 %v386, %v385
        %v395 = vld [vmem:[%s1] sm:$0xf]
        %v396 = vld [vmem:[%s1 + $0x4] sm:$0xf]
        %v397 = vld [vmem:[%s1 + $0x8] sm:$0xf]
        %v398 = vld [vmem:[%s1 + $0xc] sm:$0xf]
        %v399 = vld [vmem:[%s1 + $0x10] sm:$0xf]
        %v400 = vld [vmem:[%s1 + $0x14] sm:$0xf]
        %v401 = vld [vmem:[%s1 + $0x18] sm:$0xf]
        %v402 = vld [vmem:[%s1 + $0x1c] sm:$0xf]
        %v403 = vld [vmem:[%s1 + $0x20] sm:$0xf]
        %v404 = vld [vmem:[%s1 + $0x24] sm:$0xf]
        %v405 = vld [vmem:[%s1 + $0x28] sm:$0xf]
        %v406 = vld [vmem:[%s1 + $0x2c] sm:$0xf]
        %v407 = vld [vmem:[%s1 + $0x30] sm:$0xf]
        %v408 = vld [vmem:[%s1 + $0x34] sm:$0xf]
        %v409 = vld [vmem:[%s1 + $0x38] sm:$0xf]
        %v410 = vld [vmem:[%s1 + $0x3c] sm:$0xf]
        %v411 = vld [vmem:[%s2] sm:$0x1]
        %v413 = vlaneseq
        %v414 = vshrl.u32 %v413, 7
        %v415 = vsub.s32 0, %v414
        %v416 = vrot.slane %v411, %v415
        %v434 = vunpack.c.l.b16 %v395
        %v435 = vunpack.c.l.b16 %v396
        %v436 = vunpack.c.l.b16 %v397
        %v437 = vunpack.c.l.b16 %v398
        %v438 = vunpack.c.l.b16 %v399
        %v439 = vunpack.c.l.b16 %v400
        %v440 = vunpack.c.l.b16 %v401
        %v441 = vunpack.c.l.b16 %v402
        %v442 = vunpack.c.l.b16 %v403
        %v443 = vunpack.c.l.b16 %v404
        %v444 = vunpack.c.l.b16 %v405
        %v445 = vunpack.c.l.b16 %v406
        %v446 = vunpack.c.l.b16 %v407
        %v447 = vunpack.c.l.b16 %v408
        %v448 = vunpack.c.l.b16 %v409
        %v449 = vunpack.c.l.b16 %v410
        %v450 = vpack.c.b16 %v435, %v434
        %v451 = vpack.c.b16 %v437, %v436
        %v452 = vpack.c.b16 %v439, %v438
        %v453 = vpack.c.b16 %v441, %v440
        %v454 = vpack.c.b16 %v443, %v442
        %v455 = vpack.c.b16 %v445, %v444
        %v456 = vpack.c.b16 %v447, %v446
        %v457 = vpack.c.b16 %v449, %v448
        %466 = vmatprep.subr.bf16.mxu0 0
        %467 = vmatpush1.bf16.msra.mxu0 %v450
        %468 = vmatprep.subr.bf16.mxu0 0
        %469 = vmatpush1.bf16.msra.mxu0 %v451
        %470 = vmatprep.subr.bf16.mxu0 0
        %471 = vmatpush1.bf16.msra.mxu0 %v452
        %472 = vmatprep.subr.bf16.mxu0 0
        %473 = vmatpush1.bf16.msra.mxu0 %v453
        %474 = vmatprep.subr.bf16.mxu0 0
        %475 = vmatpush1.bf16.msra.mxu0 %v454
        %476 = vmatprep.subr.bf16.mxu0 0
        %477 = vmatpush1.bf16.msra.mxu0 %v455
        %478 = vmatprep.subr.bf16.mxu0 0
        %479 = vmatpush1.bf16.msra.mxu0 %v456
        %480 = vmatprep.subr.bf16.mxu0 0
        %481 = vmatpush1.bf16.msra.mxu0 %v457
        %482 = vmatprep.subr.bf16.mxu0 0
        %483 = vmatpush1.bf16.msra.mxu0 0
        %484 = vmatprep.subr.bf16.mxu0 0
        %485 = vmatpush1.bf16.msra.mxu0 0
        %486 = vmatprep.subr.bf16.mxu0 0
        %487 = vmatpush1.bf16.msra.mxu0 0
        %488 = vmatprep.subr.bf16.mxu0 0
        %489 = vmatpush1.bf16.msra.mxu0 0
        %490 = vmatprep.subr.bf16.mxu0 0
        %491 = vmatpush1.bf16.msra.mxu0 0
        %492 = vmatprep.subr.bf16.mxu0 0
        %493 = vmatpush1.bf16.msra.mxu0 0
        %494 = vmatprep.subr.bf16.mxu0 0
        %495 = vmatpush1.bf16.msra.mxu0 0
        %496 = vmatprep.subr.bf16.mxu0 0
        %497 = vmatpush1.bf16.msra.mxu0 0
        %498 = vmatprep.mubr.bf16.mxu0 0
        %499 = vmatmul.mubr.bf16.gmra.mrb[0].mxu0 %v387
        %v500 = vpop.f32.mrb[0].mxu0
        %v501 = vadd.f32 %v416, %v500
        %v502 = vpop.f32.mrb[0].mxu0
        %v503 = vpop.f32.mrb[0].mxu0
        %v504 = vadd.f32 %v416, %v503
        %v505 = vpop.f32.mrb[0].mxu0
        %506 = vmatprep.mubr.bf16.mxu0 0
        %507 = vmatmul.mubr.bf16.gmra.mrb[0].mxu0 %v388
        %v508 = vpop.f32.mrb[0].mxu0
        %v509 = vadd.f32 %v416, %v508
        %v510 = vpop.f32.mrb[0].mxu0
        %v511 = vpop.f32.mrb[0].mxu0
        %v512 = vadd.f32 %v416, %v511
        %v513 = vpop.f32.mrb[0].mxu0
        %514 = vmatprep.mubr.bf16.mxu0 0
        %515 = vmatmul.mubr.bf16.gmra.mrb[0].mxu0 %v389
        %v516 = vpop.f32.mrb[0].mxu0
        %v517 = vadd.f32 %v416, %v516
        %v518 = vpop.f32.mrb[0].mxu0
        %v519 = vpop.f32.mrb[0].mxu0
        %v520 = vadd.f32 %v416, %v519
        %v521 = vpop.f32.mrb[0].mxu0
        %522 = vmatprep.mubr.bf16.mxu0 0
        %523 = vmatmul.mubr.bf16.gmra.mrb[0].mxu0 %v390
        %v524 = vpop.f32.mrb[0].mxu0
        %v525 = vadd.f32 %v416, %v524
        %v526 = vpop.f32.mrb[0].mxu0
        %v527 = vpop.f32.mrb[0].mxu0
        %v528 = vadd.f32 %v416, %v527
        %v529 = vpop.f32.mrb[0].mxu0
        %530 = vmatprep.mubr.bf16.mxu0 0
        %531 = vmatmul.mubr.bf16.gmra.mrb[0].mxu0 %v391
        %v532 = vpop.f32.mrb[0].mxu0
        %v533 = vadd.f32 %v416, %v532
        %v534 = vpop.f32.mrb[0].mxu0
        %v535 = vpop.f32.mrb[0].mxu0
        %v536 = vadd.f32 %v416, %v535
        %v537 = vpop.f32.mrb[0].mxu0
        %538 = vmatprep.mubr.bf16.mxu0 0
        %539 = vmatmul.mubr.bf16.gmra.mrb[0].mxu0 %v392
        %v540 = vpop.f32.mrb[0].mxu0
        %v541 = vadd.f32 %v416, %v540
        %v542 = vpop.f32.mrb[0].mxu0
        %v543 = vpop.f32.mrb[0].mxu0
        %v544 = vadd.f32 %v416, %v543
        %v545 = vpop.f32.mrb[0].mxu0
        %546 = vmatprep.mubr.bf16.mxu0 0
        %547 = vmatmul.mubr.bf16.gmra.mrb[0].mxu0 %v393
        %v548 = vpop.f32.mrb[0].mxu0
        %v549 = vadd.f32 %v416, %v548
        %v550 = vpop.f32.mrb[0].mxu0
        %v551 = vpop.f32.mrb[0].mxu0
        %v552 = vadd.f32 %v416, %v551
        %v553 = vpop.f32.mrb[0].mxu0
        %554 = vmatprep.mubr.bf16.mxu0 0
        %555 = vmatmul.mubr.bf16.gmra.mrb[0].mxu0 %v394
        %v556 = vpop.f32.mrb[0].mxu0
        %v557 = vadd.f32 %v416, %v556
        %v558 = vpop.f32.mrb[0].mxu0
        %v559 = vpop.f32.mrb[0].mxu0
        %v560 = vadd.f32 %v416, %v559
        %v561 = vpop.f32.mrb[0].mxu0
        %562 = vdwg.mxu0
        %v563 = vmax.f32 %v501, 0.0
        %v564 = vmax.f32 %v504, 0.0
        %v565 = vmax.f32 %v509, 0.0
        %v566 = vmax.f32 %v512, 0.0
        %v567 = vmax.f32 %v517, 0.0
        %v568 = vmax.f32 %v520, 0.0
        %v569 = vmax.f32 %v525, 0.0
        %v570 = vmax.f32 %v528, 0.0
        %v571 = vmax.f32 %v533, 0.0
        %v572 = vmax.f32 %v536, 0.0
        %v573 = vmax.f32 %v541, 0.0
        %v574 = vmax.f32 %v544, 0.0
        %v575 = vmax.f32 %v549, 0.0
        %v576 = vmax.f32 %v552, 0.0
        %v577 = vmax.f32 %v557, 0.0
        %v578 = vmax.f32 %v560, 0.0
        %v579 = vmin.f32 %v563, 6.0
        %v580 = vmin.f32 %v564, 6.0
        %v581 = vmin.f32 %v565, 6.0
        %v582 = vmin.f32 %v566, 6.0
        %v583 = vmin.f32 %v567, 6.0
        %v584 = vmin.f32 %v568, 6.0
        %v585 = vmin.f32 %v569, 6.0
        %v586 = vmin.f32 %v570, 6.0
        %v587 = vmin.f32 %v571, 6.0
        %v588 = vmin.f32 %v572, 6.0
        %v589 = vmin.f32 %v573, 6.0
        %v590 = vmin.f32 %v574, 6.0
        %v591 = vmin.f32 %v575, 6.0
        %v592 = vmin.f32 %v576, 6.0
        %v593 = vmin.f32 %v577, 6.0
        %v594 = vmin.f32 %v578, 6.0
        %595 = vst [vmem:[#allocation2 + $0x18] sm:$0xff] %v579
        %596 = vst [vmem:[#allocation2 + $0x20] sm:$0xff] %v580
        %597 = vst [vmem:[#allocation2 + $0x28] sm:$0xff] %v581
        %598 = vst [vmem:[#allocation2 + $0x30] sm:$0xff] %v582
        %599 = vst [vmem:[#allocation2 + $0x38] sm:$0xff] %v583
        %600 = vst [vmem:[#allocation2 + $0x40] sm:$0xff] %v584
        %601 = vst [vmem:[#allocation2 + $0x48] sm:$0xff] %v585
        %602 = vst [vmem:[#allocation2 + $0x50] sm:$0xff] %v586
        %603 = vst [vmem:[#allocation2 + $0x58] sm:$0xff] %v587
        %604 = vst [vmem:[#allocation2 + $0x60] sm:$0xff] %v588
        %605 = vst [vmem:[#allocation2 + $0x68] sm:$0xff] %v589
        %606 = vst [vmem:[#allocation2 + $0x70] sm:$0xff] %v590
        %607 = vst [vmem:[#allocation2 + $0x78] sm:$0xff] %v591
        %608 = vst [vmem:[#allocation2 + $0x80] sm:$0xff] %v592
        %609 = vst [vmem:[#allocation2 + $0x88] sm:$0xff] %v593
        %610 = vst [vmem:[#allocation2 + $0x90] sm:$0xff] %v594
        %p611 = scmp.eq.s32.totalorder %s31, 0
        // Predicated region
        $region61: #{tpu_custom_call.1} parent=55 // pred_check
          %p612 = pneg %p611
        $region62: #{tpu_custom_call.1} parent=55 // pred_check_branch
          %614 = sbr.rel (%p612) target = $region64
        $region63: #{tpu_custom_call.1} parent=55 // pred_region
          %615 = vst [vmem:[#allocation2 + $0x8] sm:$0xff] 0.0
          %616 = vst [vmem:[#allocation2 + $0x10] sm:$0xff] 0.0
        $region64: #{tpu_custom_call.1} parent=55 // pred_fallthru
          _
        %p617 = scmp.gt.s32.totalorder %s31, 0
        // Predicated region
        $region65: #{tpu_custom_call.1} parent=55 // pred_check
          %p618 = pneg %p617
        $region66: #{tpu_custom_call.1} parent=55 // pred_check_branch
          %620 = sbr.rel (%p618) target = $region68
        $region67: #{tpu_custom_call.1} parent=55 // pred_region
          %s621 = ssub.s32 %s367, 1
          %s622 = smul.u32 %s621, 16
          %s623 = scalar_lea.vmem %s330, %s622 [#allocation3]
          %v624 = vld [vmem:[%s623] sm:$0xff]
          %v625 = vld [vmem:[%s623 + $0x8] sm:$0xff]
          %v626 = vpack.c.bf16 %v625, %v624
          %v627 = vld [vmem:[%s1] sm:$0xf]
          %v628 = vld [vmem:[%s1 + $0x4] sm:$0xf]
          %v629 = vld [vmem:[%s1 + $0x8] sm:$0xf]
          %v630 = vld [vmem:[%s1 + $0xc] sm:$0xf]
          %v631 = vld [vmem:[%s1 + $0x10] sm:$0xf]
          %v632 = vld [vmem:[%s1 + $0x14] sm:$0xf]
          %v633 = vld [vmem:[%s1 + $0x18] sm:$0xf]
          %v634 = vld [vmem:[%s1 + $0x1c] sm:$0xf]
          %v635 = vld [vmem:[%s1 + $0x20] sm:$0xf]
          %v636 = vld [vmem:[%s1 + $0x24] sm:$0xf]
          %v637 = vld [vmem:[%s1 + $0x28] sm:$0xf]
          %v638 = vld [vmem:[%s1 + $0x2c] sm:$0xf]
          %v639 = vld [vmem:[%s1 + $0x30] sm:$0xf]
          %v640 = vld [vmem:[%s1 + $0x34] sm:$0xf]
          %v641 = vld [vmem:[%s1 + $0x38] sm:$0xf]
          %v642 = vld [vmem:[%s1 + $0x3c] sm:$0xf]
          %v643 = vld [vmem:[%s2] sm:$0x1]
          %v645 = vlaneseq
          %v646 = vshrl.u32 %v645, 7
          %v647 = vsub.s32 0, %v646
          %v648 = vrot.slane %v643, %v647
          %v666 = vunpack.c.l.b16 %v627
          %v667 = vunpack.c.l.b16 %v628
          %v668 = vunpack.c.l.b16 %v629
          %v669 = vunpack.c.l.b16 %v630
          %v670 = vunpack.c.l.b16 %v631
          %v671 = vunpack.c.l.b16 %v632
          %v672 = vunpack.c.l.b16 %v633
          %v673 = vunpack.c.l.b16 %v634
          %v674 = vunpack.c.l.b16 %v635
          %v675 = vunpack.c.l.b16 %v636
          %v676 = vunpack.c.l.b16 %v637
          %v677 = vunpack.c.l.b16 %v638
          %v678 = vunpack.c.l.b16 %v639
          %v679 = vunpack.c.l.b16 %v640
          %v680 = vunpack.c.l.b16 %v641
          %v681 = vunpack.c.l.b16 %v642
          %v682 = vpack.c.b16 %v667, %v666
          %v683 = vpack.c.b16 %v669, %v668
          %v684 = vpack.c.b16 %v671, %v670
          %v685 = vpack.c.b16 %v673, %v672
          %v686 = vpack.c.b16 %v675, %v674
          %v687 = vpack.c.b16 %v677, %v676
          %v688 = vpack.c.b16 %v679, %v678
          %v689 = vpack.c.b16 %v681, %v680
          %698 = vmatprep.subr.bf16.mxu0 0
          %699 = vmatpush1.bf16.msra.mxu0 %v682
          %700 = vmatprep.subr.bf16.mxu0 0
          %701 = vmatpush1.bf16.msra.mxu0 %v683
          %702 = vmatprep.subr.bf16.mxu0 0
          %703 = vmatpush1.bf16.msra.mxu0 %v684
          %704 = vmatprep.subr.bf16.mxu0 0
          %705 = vmatpush1.bf16.msra.mxu0 %v685
          %706 = vmatprep.subr.bf16.mxu0 0
          %707 = vmatpush1.bf16.msra.mxu0 %v686
          %708 = vmatprep.subr.bf16.mxu0 0
          %709 = vmatpush1.bf16.msra.mxu0 %v687
          %710 = vmatprep.subr.bf16.mxu0 0
          %711 = vmatpush1.bf16.msra.mxu0 %v688
          %712 = vmatprep.subr.bf16.mxu0 0
          %713 = vmatpush1.bf16.msra.mxu0 %v689
          %714 = vmatprep.subr.bf16.mxu0 0
          %715 = vmatpush1.bf16.msra.mxu0 0
          %716 = vmatprep.subr.bf16.mxu0 0
          %717 = vmatpush1.bf16.msra.mxu0 0
          %718 = vmatprep.subr.bf16.mxu0 0
          %719 = vmatpush1.bf16.msra.mxu0 0
          %720 = vmatprep.subr.bf16.mxu0 0
          %721 = vmatpush1.bf16.msra.mxu0 0
          %722 = vmatprep.subr.bf16.mxu0 0
          %723 = vmatpush1.bf16.msra.mxu0 0
          %724 = vmatprep.subr.bf16.mxu0 0
          %725 = vmatpush1.bf16.msra.mxu0 0
          %726 = vmatprep.subr.bf16.mxu0 0
          %727 = vmatpush1.bf16.msra.mxu0 0
          %728 = vmatprep.subr.bf16.mxu0 0
          %729 = vmatpush1.bf16.msra.mxu0 0
          %730 = vmatprep.mubr.bf16.mxu0 0
          %731 = vmatmul.mubr.bf16.gmra.mrb[0].mxu0 %v626
          %v732 = vpop.f32.mrb[0].mxu0
          %v733 = vadd.f32 %v648, %v732
          %v734 = vpop.f32.mrb[0].mxu0
          %v735 = vpop.f32.mrb[0].mxu0
          %v736 = vadd.f32 %v648, %v735
          %v737 = vpop.f32.mrb[0].mxu0
          %738 = vdwg.mxu0
          %v739 = vmax.f32 %v733, 0.0
          %v740 = vmax.f32 %v736, 0.0
          %v741 = vmin.f32 %v739, 6.0
          %v742 = vmin.f32 %v740, 6.0
          %743 = vst [vmem:[#allocation2 + $0x8] sm:$0xff] %v741
          %744 = vst [vmem:[#allocation2 + $0x10] sm:$0xff] %v742
        $region68: #{tpu_custom_call.1} parent=55 // pred_fallthru
          _
        %745 = vst [vmem:[#allocation2 + $0xa8] sm:$0xff] 0.0
        %p746 = scmp.eq.s32.totalorder %s31, 1
        // Predicated region
        $region69: #{tpu_custom_call.1} parent=55 // pred_check
          %p747 = pneg %p746
        $region70: #{tpu_custom_call.1} parent=55 // pred_check_branch
          %749 = sbr.rel (%p747) target = $region72
        $region71: #{tpu_custom_call.1} parent=55 // pred_region
          %750 = vst [vmem:[#allocation2 + $0x98] sm:$0xff] 0.0
          %751 = vst [vmem:[#allocation2 + $0xa0] sm:$0xff] 0.0
        $region72: #{tpu_custom_call.1} parent=55 // pred_fallthru
          _
        %p752 = scmp.lt.s32.totalorder %s31, 1
        // Predicated region
        $region73: #{tpu_custom_call.1} parent=55 // pred_check
          %p753 = pneg %p752
        $region74: #{tpu_custom_call.1} parent=55 // pred_check_branch
          %755 = sbr.rel (%p753) target = $region76
        $region75: #{tpu_custom_call.1} parent=55 // pred_region
          %s756 = sadd.s32 %s367, 8
          %s757 = smul.u32 %s756, 16
          %s758 = scalar_lea.vmem %s330, %s757 [#allocation3]
          %v759 = vld [vmem:[%s758] sm:$0xff]
          %v760 = vld [vmem:[%s758 + $0x8] sm:$0xff]
          %v761 = vpack.c.bf16 %v760, %v759
          %v762 = vld [vmem:[%s1] sm:$0xf]
          %v763 = vld [vmem:[%s1 + $0x4] sm:$0xf]
          %v764 = vld [vmem:[%s1 + $0x8] sm:$0xf]
          %v765 = vld [vmem:[%s1 + $0xc] sm:$0xf]
          %v766 = vld [vmem:[%s1 + $0x10] sm:$0xf]
          %v767 = vld [vmem:[%s1 + $0x14] sm:$0xf]
          %v768 = vld [vmem:[%s1 + $0x18] sm:$0xf]
          %v769 = vld [vmem:[%s1 + $0x1c] sm:$0xf]
          %v770 = vld [vmem:[%s1 + $0x20] sm:$0xf]
          %v771 = vld [vmem:[%s1 + $0x24] sm:$0xf]
          %v772 = vld [vmem:[%s1 + $0x28] sm:$0xf]
          %v773 = vld [vmem:[%s1 + $0x2c] sm:$0xf]
          %v774 = vld [vmem:[%s1 + $0x30] sm:$0xf]
          %v775 = vld [vmem:[%s1 + $0x34] sm:$0xf]
          %v776 = vld [vmem:[%s1 + $0x38] sm:$0xf]
          %v777 = vld [vmem:[%s1 + $0x3c] sm:$0xf]
          %v778 = vld [vmem:[%s2] sm:$0x1]
          %v780 = vlaneseq
          %v781 = vshrl.u32 %v780, 7
          %v782 = vsub.s32 0, %v781
          %v783 = vrot.slane %v778, %v782
          %v801 = vunpack.c.l.b16 %v762
          %v802 = vunpack.c.l.b16 %v763
          %v803 = vunpack.c.l.b16 %v764
          %v804 = vunpack.c.l.b16 %v765
          %v805 = vunpack.c.l.b16 %v766
          %v806 = vunpack.c.l.b16 %v767
          %v807 = vunpack.c.l.b16 %v768
          %v808 = vunpack.c.l.b16 %v769
          %v809 = vunpack.c.l.b16 %v770
          %v810 = vunpack.c.l.b16 %v771
          %v811 = vunpack.c.l.b16 %v772
          %v812 = vunpack.c.l.b16 %v773
          %v813 = vunpack.c.l.b16 %v774
          %v814 = vunpack.c.l.b16 %v775
          %v815 = vunpack.c.l.b16 %v776
          %v816 = vunpack.c.l.b16 %v777
          %v817 = vpack.c.b16 %v802, %v801
          %v818 = vpack.c.b16 %v804, %v803
          %v819 = vpack.c.b16 %v806, %v805
          %v820 = vpack.c.b16 %v808, %v807
          %v821 = vpack.c.b16 %v810, %v809
          %v822 = vpack.c.b16 %v812, %v811
          %v823 = vpack.c.b16 %v814, %v813
          %v824 = vpack.c.b16 %v816, %v815
          %833 = vmatprep.subr.bf16.mxu0 0
          %834 = vmatpush1.bf16.msra.mxu0 %v817
          %835 = vmatprep.subr.bf16.mxu0 0
          %836 = vmatpush1.bf16.msra.mxu0 %v818
          %837 = vmatprep.subr.bf16.mxu0 0
          %838 = vmatpush1.bf16.msra.mxu0 %v819
          %839 = vmatprep.subr.bf16.mxu0 0
          %840 = vmatpush1.bf16.msra.mxu0 %v820
          %841 = vmatprep.subr.bf16.mxu0 0
          %842 = vmatpush1.bf16.msra.mxu0 %v821
          %843 = vmatprep.subr.bf16.mxu0 0
          %844 = vmatpush1.bf16.msra.mxu0 %v822
          %845 = vmatprep.subr.bf16.mxu0 0
          %846 = vmatpush1.bf16.msra.mxu0 %v823
          %847 = vmatprep.subr.bf16.mxu0 0
          %848 = vmatpush1.bf16.msra.mxu0 %v824
          %849 = vmatprep.subr.bf16.mxu0 0
          %850 = vmatpush1.bf16.msra.mxu0 0
          %851 = vmatprep.subr.bf16.mxu0 0
          %852 = vmatpush1.bf16.msra.mxu0 0
          %853 = vmatprep.subr.bf16.mxu0 0
          %854 = vmatpush1.bf16.msra.mxu0 0
          %855 = vmatprep.subr.bf16.mxu0 0
          %856 = vmatpush1.bf16.msra.mxu0 0
          %857 = vmatprep.subr.bf16.mxu0 0
          %858 = vmatpush1.bf16.msra.mxu0 0
          %859 = vmatprep.subr.bf16.mxu0 0
          %860 = vmatpush1.bf16.msra.mxu0 0
          %861 = vmatprep.subr.bf16.mxu0 0
          %862 = vmatpush1.bf16.msra.mxu0 0
          %863 = vmatprep.subr.bf16.mxu0 0
          %864 = vmatpush1.bf16.msra.mxu0 0
          %865 = vmatprep.mubr.bf16.mxu0 0
          %866 = vmatmul.mubr.bf16.gmra.mrb[0].mxu0 %v761
          %v867 = vpop.f32.mrb[0].mxu0
          %v868 = vadd.f32 %v783, %v867
          %v869 = vpop.f32.mrb[0].mxu0
          %v870 = vpop.f32.mrb[0].mxu0
          %v871 = vadd.f32 %v783, %v870
          %v872 = vpop.f32.mrb[0].mxu0
          %873 = vdwg.mxu0
          %v874 = vmax.f32 %v868, 0.0
          %v875 = vmax.f32 %v871, 0.0
          %v876 = vmin.f32 %v874, 6.0
          %v877 = vmin.f32 %v875, 6.0
          %878 = vst [vmem:[#allocation2 + $0x98] sm:$0xff] %v876
          %879 = vst [vmem:[#allocation2 + $0xa0] sm:$0xff] %v877
        $region76: #{tpu_custom_call.1} parent=55 // pred_fallthru
          _
        %v880 = vld [vmem:[%s7] sm:$0xff]
        %v881 = vld [vmem:[%s7 + $0x8] sm:$0xff]
        %v882 = vld [vmem:[%s7 + $0x10] sm:$0xff]
        %v883 = vld [vmem:[%s7 + $0x18] sm:$0xff]
        %v884 = vld [vmem:[%s7 + $0x20] sm:$0xff]
        %v885 = vld [vmem:[%s7 + $0x28] sm:$0xff]
        %v886 = vld [vmem:[%s7 + $0x30] sm:$0xff]
        %v887 = vld [vmem:[%s7 + $0x38] sm:$0xff]
        %v888 = vld [vmem:[%s7 + $0x40] sm:$0xff]
        %v889 = vld [vmem:[%s7 + $0x48] sm:$0xff]
        %v890 = vld [vmem:[%s7 + $0x50] sm:$0xff]
        %v891 = vld [vmem:[%s7 + $0x58] sm:$0xff]
        %v892 = vld [vmem:[%s7 + $0x60] sm:$0xff]
        %v893 = vld [vmem:[%s7 + $0x68] sm:$0xff]
        %v894 = vld [vmem:[%s7 + $0x70] sm:$0xff]
        %v895 = vld [vmem:[%s7 + $0x78] sm:$0xff]
        %v896 = vld [vmem:[%s8] sm:$0xff]
        %v897 = vld [vmem:[%s8 + $0x8] sm:$0xff]
        %v898 = vld [vmem:[%s8 + $0x10] sm:$0xff]
        %v899 = vld [vmem:[%s8 + $0x18] sm:$0xff]
        %v900 = vld [vmem:[%s8 + $0x20] sm:$0xff]
        %v901 = vld [vmem:[%s8 + $0x28] sm:$0xff]
        %v902 = vld [vmem:[%s8 + $0x30] sm:$0xff]
        %v903 = vld [vmem:[%s8 + $0x38] sm:$0xff]
        %v904 = vld [vmem:[%s8 + $0x40] sm:$0xff]
        %v905 = vld [vmem:[%s8 + $0x48] sm:$0xff]
        %v906 = vld [vmem:[%s8 + $0x50] sm:$0xff]
        %v907 = vld [vmem:[%s8 + $0x58] sm:$0xff]
        %v908 = vld [vmem:[%s8 + $0x60] sm:$0xff]
        %v909 = vld [vmem:[%s8 + $0x68] sm:$0xff]
        %v910 = vld [vmem:[%s8 + $0x70] sm:$0xff]
        %v911 = vld [vmem:[%s8 + $0x78] sm:$0xff]
        %v912 = vld [vmem:[#allocation2 + $0x7] sm:$0xff]
        %v913 = vld [vmem:[#allocation2 + $0xf] sm:$0xff]
        %v914 = vld [vmem:[#allocation2 + $0x17] sm:$0xff]
        %v915 = vld [vmem:[#allocation2 + $0x1f] sm:$0xff]
        %v916 = vld [vmem:[#allocation2 + $0x27] sm:$0xff]
        %v917 = vld [vmem:[#allocation2 + $0x2f] sm:$0xff]
        %v918 = vld [vmem:[#allocation2 + $0x37] sm:$0xff]
        %v919 = vld [vmem:[#allocation2 + $0x3f] sm:$0xff]
        %v920 = vld [vmem:[#allocation2 + $0x47] sm:$0xff]
        %v921 = vld [vmem:[#allocation2 + $0x4f] sm:$0xff]
        %v922 = vld [vmem:[#allocation2 + $0x57] sm:$0xff]
        %v923 = vld [vmem:[#allocation2 + $0x5f] sm:$0xff]
        %v924 = vld [vmem:[#allocation2 + $0x67] sm:$0xff]
        %v925 = vld [vmem:[#allocation2 + $0x6f] sm:$0xff]
        %v926 = vld [vmem:[#allocation2 + $0x77] sm:$0xff]
        %v927 = vld [vmem:[#allocation2 + $0x7f] sm:$0xff]
        %929 = vset.pattern.permute.xlu0 0
        %930 = vperm.xlu0 %929, %v880
        %v931 = vpop.permute.xlu0 %930
        %934 = vset.pattern.permute.xlu0 0
        %935 = vperm.xlu0 %934, %v881
        %v936 = vpop.permute.xlu0 %935
        %939 = vset.pattern.permute.xlu0 0
        %940 = vperm.xlu0 %939, %v882
        %v941 = vpop.permute.xlu0 %940
        %944 = vset.pattern.permute.xlu0 0
        %945 = vperm.xlu0 %944, %v883
        %v946 = vpop.permute.xlu0 %945
        %949 = vset.pattern.permute.xlu0 0
        %950 = vperm.xlu0 %949, %v884
        %v951 = vpop.permute.xlu0 %950
        %954 = vset.pattern.permute.xlu0 0
        %955 = vperm.xlu0 %954, %v885
        %v956 = vpop.permute.xlu0 %955
        %959 = vset.pattern.permute.xlu0 0
        %960 = vperm.xlu0 %959, %v886
        %v961 = vpop.permute.xlu0 %960
        %964 = vset.pattern.permute.xlu0 0
        %965 = vperm.xlu0 %964, %v887
        %v966 = vpop.permute.xlu0 %965
        %969 = vset.pattern.permute.xlu0 0
        %970 = vperm.xlu0 %969, %v888
        %v971 = vpop.permute.xlu0 %970
        %974 = vset.pattern.permute.xlu0 0
        %975 = vperm.xlu0 %974, %v889
        %v976 = vpop.permute.xlu0 %975
        %979 = vset.pattern.permute.xlu0 0
        %980 = vperm.xlu0 %979, %v890
        %v981 = vpop.permute.xlu0 %980
        %984 = vset.pattern.permute.xlu0 0
        %985 = vperm.xlu0 %984, %v891
        %v986 = vpop.permute.xlu0 %985
        %989 = vset.pattern.permute.xlu0 0
        %990 = vperm.xlu0 %989, %v892
        %v991 = vpop.permute.xlu0 %990
        %994 = vset.pattern.permute.xlu0 0
        %995 = vperm.xlu0 %994, %v893
        %v996 = vpop.permute.xlu0 %995
        %999 = vset.pattern.permute.xlu0 0
        %1000 = vperm.xlu0 %999, %v894
        %v1001 = vpop.permute.xlu0 %1000
        %1004 = vset.pattern.permute.xlu0 0
        %1005 = vperm.xlu0 %1004, %v895
        %v1006 = vpop.permute.xlu0 %1005
        %v1008 = vmul.f32 %v912, %v931
        %v1009 = vmul.f32 %v913, %v936
        %v1010 = vmul.f32 %v914, %v941
        %v1011 = vmul.f32 %v915, %v946
        %v1012 = vmul.f32 %v916, %v951
        %v1013 = vmul.f32 %v917, %v956
        %v1014 = vmul.f32 %v918, %v961
        %v1015 = vmul.f32 %v919, %v966
        %v1016 = vmul.f32 %v920, %v971
        %v1017 = vmul.f32 %v921, %v976
        %v1018 = vmul.f32 %v922, %v981
        %v1019 = vmul.f32 %v923, %v986
        %v1020 = vmul.f32 %v924, %v991
        %v1021 = vmul.f32 %v925, %v996
        %v1022 = vmul.f32 %v926, %v1001
        %v1023 = vmul.f32 %v927, %v1006
        %v1024 = vld [vmem:[%s3] sm:$0x1]
        %v1025 = vlaneseq
        %v1026 = vshrl.u32 %v1025, 7
        %v1027 = vsub.s32 0, %v1026
        %v1028 = vrot.slane %v1024, %v1027
        %v1029 = vmul.f32 %v1008, %v1028
        %v1030 = vmul.f32 %v1009, %v1028
        %v1031 = vmul.f32 %v1010, %v1028
        %v1032 = vmul.f32 %v1011, %v1028
        %v1033 = vmul.f32 %v1012, %v1028
        %v1034 = vmul.f32 %v1013, %v1028
        %v1035 = vmul.f32 %v1014, %v1028
        %v1036 = vmul.f32 %v1015, %v1028
        %v1037 = vmul.f32 %v1016, %v1028
        %v1038 = vmul.f32 %v1017, %v1028
        %v1039 = vmul.f32 %v1018, %v1028
        %v1040 = vmul.f32 %v1019, %v1028
        %v1041 = vmul.f32 %v1020, %v1028
        %v1042 = vmul.f32 %v1021, %v1028
        %v1043 = vmul.f32 %v1022, %v1028
        %v1044 = vmul.f32 %v1023, %v1028
        %v1045 = vadd.f32 %v1029, 0.0
        %v1046 = vadd.f32 %v1030, 0.0
        %v1047 = vadd.f32 %v1031, 0.0
        %v1048 = vadd.f32 %v1032, 0.0
        %v1049 = vadd.f32 %v1033, 0.0
        %v1050 = vadd.f32 %v1034, 0.0
        %v1051 = vadd.f32 %v1035, 0.0
        %v1052 = vadd.f32 %v1036, 0.0
        %v1053 = vadd.f32 %v1037, 0.0
        %v1054 = vadd.f32 %v1038, 0.0
        %v1055 = vadd.f32 %v1039, 0.0
        %v1056 = vadd.f32 %v1040, 0.0
        %v1057 = vadd.f32 %v1041, 0.0
        %v1058 = vadd.f32 %v1042, 0.0
        %v1059 = vadd.f32 %v1043, 0.0
        %v1060 = vadd.f32 %v1044, 0.0
        %v1061 = vld [vmem:[#allocation2 + $0x8] sm:$0xff]
        %v1062 = vld [vmem:[#allocation2 + $0x10] sm:$0xff]
        %v1063 = vld [vmem:[#allocation2 + $0x18] sm:$0xff]
        %v1064 = vld [vmem:[#allocation2 + $0x20] sm:$0xff]
        %v1065 = vld [vmem:[#allocation2 + $0x28] sm:$0xff]
        %v1066 = vld [vmem:[#allocation2 + $0x30] sm:$0xff]
        %v1067 = vld [vmem:[#allocation2 + $0x38] sm:$0xff]
        %v1068 = vld [vmem:[#allocation2 + $0x40] sm:$0xff]
        %v1069 = vld [vmem:[#allocation2 + $0x48] sm:$0xff]
        %v1070 = vld [vmem:[#allocation2 + $0x50] sm:$0xff]
        %v1071 = vld [vmem:[#allocation2 + $0x58] sm:$0xff]
        %v1072 = vld [vmem:[#allocation2 + $0x60] sm:$0xff]
        %v1073 = vld [vmem:[#allocation2 + $0x68] sm:$0xff]
        %v1074 = vld [vmem:[#allocation2 + $0x70] sm:$0xff]
        %v1075 = vld [vmem:[#allocation2 + $0x78] sm:$0xff]
        %v1076 = vld [vmem:[#allocation2 + $0x80] sm:$0xff]
        %v1077 = vld [vmem:[%s3 + $0x1] sm:$0x1]
        %v1078 = vlaneseq
        %v1079 = vshrl.u32 %v1078, 7
        %v1080 = vsub.s32 0, %v1079
        %v1081 = vrot.slane %v1077, %v1080
        %v1082 = vmul.f32 %v1061, %v1081
        %v1083 = vmul.f32 %v1062, %v1081
        %v1084 = vmul.f32 %v1063, %v1081
        %v1085 = vmul.f32 %v1064, %v1081
        %v1086 = vmul.f32 %v1065, %v1081
        %v1087 = vmul.f32 %v1066, %v1081
        %v1088 = vmul.f32 %v1067, %v1081
        %v1089 = vmul.f32 %v1068, %v1081
        %v1090 = vmul.f32 %v1069, %v1081
        %v1091 = vmul.f32 %v1070, %v1081
        %v1092 = vmul.f32 %v1071, %v1081
        %v1093 = vmul.f32 %v1072, %v1081
        %v1094 = vmul.f32 %v1073, %v1081
        %v1095 = vmul.f32 %v1074, %v1081
        %v1096 = vmul.f32 %v1075, %v1081
        %v1097 = vmul.f32 %v1076, %v1081
        %v1098 = vadd.f32 %v1045, %v1082
        %v1099 = vadd.f32 %v1046, %v1083
        %v1100 = vadd.f32 %v1047, %v1084
        %v1101 = vadd.f32 %v1048, %v1085
        %v1102 = vadd.f32 %v1049, %v1086
        %v1103 = vadd.f32 %v1050, %v1087
        %v1104 = vadd.f32 %v1051, %v1088
        %v1105 = vadd.f32 %v1052, %v1089
        %v1106 = vadd.f32 %v1053, %v1090
        %v1107 = vadd.f32 %v1054, %v1091
        %v1108 = vadd.f32 %v1055, %v1092
        %v1109 = vadd.f32 %v1056, %v1093
        %v1110 = vadd.f32 %v1057, %v1094
        %v1111 = vadd.f32 %v1058, %v1095
        %v1112 = vadd.f32 %v1059, %v1096
        %v1113 = vadd.f32 %v1060, %v1097
        %v1114 = vld [vmem:[#allocation2 + $0x9] sm:$0xff]
        %v1115 = vld [vmem:[#allocation2 + $0x11] sm:$0xff]
        %v1116 = vld [vmem:[#allocation2 + $0x19] sm:$0xff]
        %v1117 = vld [vmem:[#allocation2 + $0x21] sm:$0xff]
        %v1118 = vld [vmem:[#allocation2 + $0x29] sm:$0xff]
        %v1119 = vld [vmem:[#allocation2 + $0x31] sm:$0xff]
        %v1120 = vld [vmem:[#allocation2 + $0x39] sm:$0xff]
        %v1121 = vld [vmem:[#allocation2 + $0x41] sm:$0xff]
        %v1122 = vld [vmem:[#allocation2 + $0x49] sm:$0xff]
        %v1123 = vld [vmem:[#allocation2 + $0x51] sm:$0xff]
        %v1124 = vld [vmem:[#allocation2 + $0x59] sm:$0xff]
        %v1125 = vld [vmem:[#allocation2 + $0x61] sm:$0xff]
        %v1126 = vld [vmem:[#allocation2 + $0x69] sm:$0xff]
        %v1127 = vld [vmem:[#allocation2 + $0x71] sm:$0xff]
        %v1128 = vld [vmem:[#allocation2 + $0x79] sm:$0xff]
        %v1129 = vld [vmem:[#allocation2 + $0x81] sm:$0xff]
        %1131 = vset.pattern.permute.xlu0 0
        %1132 = vperm.xlu0 %1131, %v896
        %v1133 = vpop.permute.xlu0 %1132
        %1136 = vset.pattern.permute.xlu0 0
        %1137 = vperm.xlu0 %1136, %v897
        %v1138 = vpop.permute.xlu0 %1137
        %1141 = vset.pattern.permute.xlu0 0
        %1142 = vperm.xlu0 %1141, %v898
        %v1143 = vpop.permute.xlu0 %1142
        %1146 = vset.pattern.permute.xlu0 0
        %1147 = vperm.xlu0 %1146, %v899
        %v1148 = vpop.permute.xlu0 %1147
        %1151 = vset.pattern.permute.xlu0 0
        %1152 = vperm.xlu0 %1151, %v900
        %v1153 = vpop.permute.xlu0 %1152
        %1156 = vset.pattern.permute.xlu0 0
        %1157 = vperm.xlu0 %1156, %v901
        %v1158 = vpop.permute.xlu0 %1157
        %1161 = vset.pattern.permute.xlu0 0
        %1162 = vperm.xlu0 %1161, %v902
        %v1163 = vpop.permute.xlu0 %1162
        %1166 = vset.pattern.permute.xlu0 0
        %1167 = vperm.xlu0 %1166, %v903
        %v1168 = vpop.permute.xlu0 %1167
        %1171 = vset.pattern.permute.xlu0 0
        %1172 = vperm.xlu0 %1171, %v904
        %v1173 = vpop.permute.xlu0 %1172
        %1176 = vset.pattern.permute.xlu0 0
        %1177 = vperm.xlu0 %1176, %v905
        %v1178 = vpop.permute.xlu0 %1177
        %1181 = vset.pattern.permute.xlu0 0
        %1182 = vperm.xlu0 %1181, %v906
        %v1183 = vpop.permute.xlu0 %1182
        %1186 = vset.pattern.permute.xlu0 0
        %1187 = vperm.xlu0 %1186, %v907
        %v1188 = vpop.permute.xlu0 %1187
        %1191 = vset.pattern.permute.xlu0 0
        %1192 = vperm.xlu0 %1191, %v908
        %v1193 = vpop.permute.xlu0 %1192
        %1196 = vset.pattern.permute.xlu0 0
        %1197 = vperm.xlu0 %1196, %v909
        %v1198 = vpop.permute.xlu0 %1197
        %1201 = vset.pattern.permute.xlu0 0
        %1202 = vperm.xlu0 %1201, %v910
        %v1203 = vpop.permute.xlu0 %1202
        %1206 = vset.pattern.permute.xlu0 0
        %1207 = vperm.xlu0 %1206, %v911
        %v1208 = vpop.permute.xlu0 %1207
        %v1210 = vmul.f32 %v1114, %v1133
        %v1211 = vmul.f32 %v1115, %v1138
        %v1212 = vmul.f32 %v1116, %v1143
        %v1213 = vmul.f32 %v1117, %v1148
        %v1214 = vmul.f32 %v1118, %v1153
        %v1215 = vmul.f32 %v1119, %v1158
        %v1216 = vmul.f32 %v1120, %v1163
        %v1217 = vmul.f32 %v1121, %v1168
        %v1218 = vmul.f32 %v1122, %v1173
        %v1219 = vmul.f32 %v1123, %v1178
        %v1220 = vmul.f32 %v1124, %v1183
        %v1221 = vmul.f32 %v1125, %v1188
        %v1222 = vmul.f32 %v1126, %v1193
        %v1223 = vmul.f32 %v1127, %v1198
        %v1224 = vmul.f32 %v1128, %v1203
        %v1225 = vmul.f32 %v1129, %v1208
        %v1226 = vld [vmem:[%s3 + $0x2] sm:$0x1]
        %v1227 = vlaneseq
        %v1228 = vshrl.u32 %v1227, 7
        %v1229 = vsub.s32 0, %v1228
        %v1230 = vrot.slane %v1226, %v1229
        %v1231 = vmul.f32 %v1210, %v1230
        %v1232 = vmul.f32 %v1211, %v1230
        %v1233 = vmul.f32 %v1212, %v1230
        %v1234 = vmul.f32 %v1213, %v1230
        %v1235 = vmul.f32 %v1214, %v1230
        %v1236 = vmul.f32 %v1215, %v1230
        %v1237 = vmul.f32 %v1216, %v1230
        %v1238 = vmul.f32 %v1217, %v1230
        %v1239 = vmul.f32 %v1218, %v1230
        %v1240 = vmul.f32 %v1219, %v1230
        %v1241 = vmul.f32 %v1220, %v1230
        %v1242 = vmul.f32 %v1221, %v1230
        %v1243 = vmul.f32 %v1222, %v1230
        %v1244 = vmul.f32 %v1223, %v1230
        %v1245 = vmul.f32 %v1224, %v1230
        %v1246 = vmul.f32 %v1225, %v1230
        %v1247 = vadd.f32 %v1098, %v1231
        %v1248 = vadd.f32 %v1099, %v1232
        %v1249 = vadd.f32 %v1100, %v1233
        %v1250 = vadd.f32 %v1101, %v1234
        %v1251 = vadd.f32 %v1102, %v1235
        %v1252 = vadd.f32 %v1103, %v1236
        %v1253 = vadd.f32 %v1104, %v1237
        %v1254 = vadd.f32 %v1105, %v1238
        %v1255 = vadd.f32 %v1106, %v1239
        %v1256 = vadd.f32 %v1107, %v1240
        %v1257 = vadd.f32 %v1108, %v1241
        %v1258 = vadd.f32 %v1109, %v1242
        %v1259 = vadd.f32 %v1110, %v1243
        %v1260 = vadd.f32 %v1111, %v1244
        %v1261 = vadd.f32 %v1112, %v1245
        %v1262 = vadd.f32 %v1113, %v1246
        %v1263 = vld [vmem:[#allocation2 + $0x17] sm:$0xff]
        %v1264 = vld [vmem:[#allocation2 + $0x1f] sm:$0xff]
        %v1265 = vld [vmem:[#allocation2 + $0x27] sm:$0xff]
        %v1266 = vld [vmem:[#allocation2 + $0x2f] sm:$0xff]
        %v1267 = vld [vmem:[#allocation2 + $0x37] sm:$0xff]
        %v1268 = vld [vmem:[#allocation2 + $0x3f] sm:$0xff]
        %v1269 = vld [vmem:[#allocation2 + $0x47] sm:$0xff]
        %v1270 = vld [vmem:[#allocation2 + $0x4f] sm:$0xff]
        %v1271 = vld [vmem:[#allocation2 + $0x57] sm:$0xff]
        %v1272 = vld [vmem:[#allocation2 + $0x5f] sm:$0xff]
        %v1273 = vld [vmem:[#allocation2 + $0x67] sm:$0xff]
        %v1274 = vld [vmem:[#allocation2 + $0x6f] sm:$0xff]
        %v1275 = vld [vmem:[#allocation2 + $0x77] sm:$0xff]
        %v1276 = vld [vmem:[#allocation2 + $0x7f] sm:$0xff]
        %v1277 = vld [vmem:[#allocation2 + $0x87] sm:$0xff]
        %v1278 = vld [vmem:[#allocation2 + $0x8f] sm:$0xff]
        %v1279 = vmul.f32 %v1263, %v931
        %v1280 = vmul.f32 %v1264, %v936
        %v1281 = vmul.f32 %v1265, %v941
        %v1282 = vmul.f32 %v1266, %v946
        %v1283 = vmul.f32 %v1267, %v951
        %v1284 = vmul.f32 %v1268, %v956
        %v1285 = vmul.f32 %v1269, %v961
        %v1286 = vmul.f32 %v1270, %v966
        %v1287 = vmul.f32 %v1271, %v971
        %v1288 = vmul.f32 %v1272, %v976
        %v1289 = vmul.f32 %v1273, %v981
        %v1290 = vmul.f32 %v1274, %v986
        %v1291 = vmul.f32 %v1275, %v991
        %v1292 = vmul.f32 %v1276, %v996
        %v1293 = vmul.f32 %v1277, %v1001
        %v1294 = vmul.f32 %v1278, %v1006
        %v1295 = vld [vmem:[%s3 + $0x3] sm:$0x1]
        %v1296 = vlaneseq
        %v1297 = vshrl.u32 %v1296, 7
        %v1298 = vsub.s32 0, %v1297
        %v1299 = vrot.slane %v1295, %v1298
        %v1300 = vmul.f32 %v1279, %v1299
        %v1301 = vmul.f32 %v1280, %v1299
        %v1302 = vmul.f32 %v1281, %v1299
        %v1303 = vmul.f32 %v1282, %v1299
        %v1304 = vmul.f32 %v1283, %v1299
        %v1305 = vmul.f32 %v1284, %v1299
        %v1306 = vmul.f32 %v1285, %v1299
        %v1307 = vmul.f32 %v1286, %v1299
        %v1308 = vmul.f32 %v1287, %v1299
        %v1309 = vmul.f32 %v1288, %v1299
        %v1310 = vmul.f32 %v1289, %v1299
        %v1311 = vmul.f32 %v1290, %v1299
        %v1312 = vmul.f32 %v1291, %v1299
        %v1313 = vmul.f32 %v1292, %v1299
        %v1314 = vmul.f32 %v1293, %v1299
        %v1315 = vmul.f32 %v1294, %v1299
        %v1316 = vadd.f32 %v1247, %v1300
        %v1317 = vadd.f32 %v1248, %v1301
        %v1318 = vadd.f32 %v1249, %v1302
        %v1319 = vadd.f32 %v1250, %v1303
        %v1320 = vadd.f32 %v1251, %v1304
        %v1321 = vadd.f32 %v1252, %v1305
        %v1322 = vadd.f32 %v1253, %v1306
        %v1323 = vadd.f32 %v1254, %v1307
        %v1324 = vadd.f32 %v1255, %v1308
        %v1325 = vadd.f32 %v1256, %v1309
        %v1326 = vadd.f32 %v1257, %v1310
        %v1327 = vadd.f32 %v1258, %v1311
        %v1328 = vadd.f32 %v1259, %v1312
        %v1329 = vadd.f32 %v1260, %v1313
        %v1330 = vadd.f32 %v1261, %v1314
        %v1331 = vadd.f32 %v1262, %v1315
        %v1332 = vld [vmem:[#allocation2 + $0x18] sm:$0xff]
        %v1333 = vld [vmem:[#allocation2 + $0x20] sm:$0xff]
        %v1334 = vld [vmem:[#allocation2 + $0x28] sm:$0xff]
        %v1335 = vld [vmem:[#allocation2 + $0x30] sm:$0xff]
        %v1336 = vld [vmem:[#allocation2 + $0x38] sm:$0xff]
        %v1337 = vld [vmem:[#allocation2 + $0x40] sm:$0xff]
        %v1338 = vld [vmem:[#allocation2 + $0x48] sm:$0xff]
        %v1339 = vld [vmem:[#allocation2 + $0x50] sm:$0xff]
        %v1340 = vld [vmem:[#allocation2 + $0x58] sm:$0xff]
        %v1341 = vld [vmem:[#allocation2 + $0x60] sm:$0xff]
        %v1342 = vld [vmem:[#allocation2 + $0x68] sm:$0xff]
        %v1343 = vld [vmem:[#allocation2 + $0x70] sm:$0xff]
        %v1344 = vld [vmem:[#allocation2 + $0x78] sm:$0xff]
        %v1345 = vld [vmem:[#allocation2 + $0x80] sm:$0xff]
        %v1346 = vld [vmem:[#allocation2 + $0x88] sm:$0xff]
        %v1347 = vld [vmem:[#allocation2 + $0x90] sm:$0xff]
        %v1348 = vld [vmem:[%s3 + $0x4] sm:$0x1]
        %v1349 = vlaneseq
        %v1350 = vshrl.u32 %v1349, 7
        %v1351 = vsub.s32 0, %v1350
        %v1352 = vrot.slane %v1348, %v1351
        %v1353 = vmul.f32 %v1332, %v1352
        %v1354 = vmul.f32 %v1333, %v1352
        %v1355 = vmul.f32 %v1334, %v1352
        %v1356 = vmul.f32 %v1335, %v1352
        %v1357 = vmul.f32 %v1336, %v1352
        %v1358 = vmul.f32 %v1337, %v1352
        %v1359 = vmul.f32 %v1338, %v1352
        %v1360 = vmul.f32 %v1339, %v1352
        %v1361 = vmul.f32 %v1340, %v1352
        %v1362 = vmul.f32 %v1341, %v1352
        %v1363 = vmul.f32 %v1342, %v1352
        %v1364 = vmul.f32 %v1343, %v1352
        %v1365 = vmul.f32 %v1344, %v1352
        %v1366 = vmul.f32 %v1345, %v1352
        %v1367 = vmul.f32 %v1346, %v1352
        %v1368 = vmul.f32 %v1347, %v1352
        %v1369 = vadd.f32 %v1316, %v1353
        %v1370 = vadd.f32 %v1317, %v1354
        %v1371 = vadd.f32 %v1318, %v1355
        %v1372 = vadd.f32 %v1319, %v1356
        %v1373 = vadd.f32 %v1320, %v1357
        %v1374 = vadd.f32 %v1321, %v1358
        %v1375 = vadd.f32 %v1322, %v1359
        %v1376 = vadd.f32 %v1323, %v1360
        %v1377 = vadd.f32 %v1324, %v1361
        %v1378 = vadd.f32 %v1325, %v1362
        %v1379 = vadd.f32 %v1326, %v1363
        %v1380 = vadd.f32 %v1327, %v1364
        %v1381 = vadd.f32 %v1328, %v1365
        %v1382 = vadd.f32 %v1329, %v1366
        %v1383 = vadd.f32 %v1330, %v1367
        %v1384 = vadd.f32 %v1331, %v1368
        %v1385 = vld [vmem:[#allocation2 + $0x19] sm:$0xff]
        %v1386 = vld [vmem:[#allocation2 + $0x21] sm:$0xff]
        %v1387 = vld [vmem:[#allocation2 + $0x29] sm:$0xff]
        %v1388 = vld [vmem:[#allocation2 + $0x31] sm:$0xff]
        %v1389 = vld [vmem:[#allocation2 + $0x39] sm:$0xff]
        %v1390 = vld [vmem:[#allocation2 + $0x41] sm:$0xff]
        %v1391 = vld [vmem:[#allocation2 + $0x49] sm:$0xff]
        %v1392 = vld [vmem:[#allocation2 + $0x51] sm:$0xff]
        %v1393 = vld [vmem:[#allocation2 + $0x59] sm:$0xff]
        %v1394 = vld [vmem:[#allocation2 + $0x61] sm:$0xff]
        %v1395 = vld [vmem:[#allocation2 + $0x69] sm:$0xff]
        %v1396 = vld [vmem:[#allocation2 + $0x71] sm:$0xff]
        %v1397 = vld [vmem:[#allocation2 + $0x79] sm:$0xff]
        %v1398 = vld [vmem:[#allocation2 + $0x81] sm:$0xff]
        %v1399 = vld [vmem:[#allocation2 + $0x89] sm:$0xff]
        %v1400 = vld [vmem:[#allocation2 + $0x91] sm:$0xff]
        %v1401 = vmul.f32 %v1385, %v1133
        %v1402 = vmul.f32 %v1386, %v1138
        %v1403 = vmul.f32 %v1387, %v1143
        %v1404 = vmul.f32 %v1388, %v1148
        %v1405 = vmul.f32 %v1389, %v1153
        %v1406 = vmul.f32 %v1390, %v1158
        %v1407 = vmul.f32 %v1391, %v1163
        %v1408 = vmul.f32 %v1392, %v1168
        %v1409 = vmul.f32 %v1393, %v1173
        %v1410 = vmul.f32 %v1394, %v1178
        %v1411 = vmul.f32 %v1395, %v1183
        %v1412 = vmul.f32 %v1396, %v1188
        %v1413 = vmul.f32 %v1397, %v1193
        %v1414 = vmul.f32 %v1398, %v1198
        %v1415 = vmul.f32 %v1399, %v1203
        %v1416 = vmul.f32 %v1400, %v1208
        %v1417 = vld [vmem:[%s3 + $0x5] sm:$0x1]
        %v1418 = vlaneseq
        %v1419 = vshrl.u32 %v1418, 7
        %v1420 = vsub.s32 0, %v1419
        %v1421 = vrot.slane %v1417, %v1420
        %v1422 = vmul.f32 %v1401, %v1421
        %v1423 = vmul.f32 %v1402, %v1421
        %v1424 = vmul.f32 %v1403, %v1421
        %v1425 = vmul.f32 %v1404, %v1421
        %v1426 = vmul.f32 %v1405, %v1421
        %v1427 = vmul.f32 %v1406, %v1421
        %v1428 = vmul.f32 %v1407, %v1421
        %v1429 = vmul.f32 %v1408, %v1421
        %v1430 = vmul.f32 %v1409, %v1421
        %v1431 = vmul.f32 %v1410, %v1421
        %v1432 = vmul.f32 %v1411, %v1421
        %v1433 = vmul.f32 %v1412, %v1421
        %v1434 = vmul.f32 %v1413, %v1421
        %v1435 = vmul.f32 %v1414, %v1421
        %v1436 = vmul.f32 %v1415, %v1421
        %v1437 = vmul.f32 %v1416, %v1421
        %v1438 = vadd.f32 %v1369, %v1422
        %v1439 = vadd.f32 %v1370, %v1423
        %v1440 = vadd.f32 %v1371, %v1424
        %v1441 = vadd.f32 %v1372, %v1425
        %v1442 = vadd.f32 %v1373, %v1426
        %v1443 = vadd.f32 %v1374, %v1427
        %v1444 = vadd.f32 %v1375, %v1428
        %v1445 = vadd.f32 %v1376, %v1429
        %v1446 = vadd.f32 %v1377, %v1430
        %v1447 = vadd.f32 %v1378, %v1431
        %v1448 = vadd.f32 %v1379, %v1432
        %v1449 = vadd.f32 %v1380, %v1433
        %v1450 = vadd.f32 %v1381, %v1434
        %v1451 = vadd.f32 %v1382, %v1435
        %v1452 = vadd.f32 %v1383, %v1436
        %v1453 = vadd.f32 %v1384, %v1437
        %v1454 = vld [vmem:[#allocation2 + $0x97] sm:$0xff]
        %v1455 = vld [vmem:[#allocation2 + $0x9f] sm:$0xff]
        %v1456 = vmul.f32 %v1265, %v931
        %v1457 = vmul.f32 %v1266, %v936
        %v1458 = vmul.f32 %v1267, %v941
        %v1459 = vmul.f32 %v1268, %v946
        %v1460 = vmul.f32 %v1269, %v951
        %v1461 = vmul.f32 %v1270, %v956
        %v1462 = vmul.f32 %v1271, %v961
        %v1463 = vmul.f32 %v1272, %v966
        %v1464 = vmul.f32 %v1273, %v971
        %v1465 = vmul.f32 %v1274, %v976
        %v1466 = vmul.f32 %v1275, %v981
        %v1467 = vmul.f32 %v1276, %v986
        %v1468 = vmul.f32 %v1277, %v991
        %v1469 = vmul.f32 %v1278, %v996
        %v1470 = vmul.f32 %v1454, %v1001
        %v1471 = vmul.f32 %v1455, %v1006
        %v1472 = vld [vmem:[%s3 + $0x6] sm:$0x1]
        %v1473 = vlaneseq
        %v1474 = vshrl.u32 %v1473, 7
        %v1475 = vsub.s32 0, %v1474
        %v1476 = vrot.slane %v1472, %v1475
        %v1477 = vmul.f32 %v1456, %v1476
        %v1478 = vmul.f32 %v1457, %v1476
        %v1479 = vmul.f32 %v1458, %v1476
        %v1480 = vmul.f32 %v1459, %v1476
        %v1481 = vmul.f32 %v1460, %v1476
        %v1482 = vmul.f32 %v1461, %v1476
        %v1483 = vmul.f32 %v1462, %v1476
        %v1484 = vmul.f32 %v1463, %v1476
        %v1485 = vmul.f32 %v1464, %v1476
        %v1486 = vmul.f32 %v1465, %v1476
        %v1487 = vmul.f32 %v1466, %v1476
        %v1488 = vmul.f32 %v1467, %v1476
        %v1489 = vmul.f32 %v1468, %v1476
        %v1490 = vmul.f32 %v1469, %v1476
        %v1491 = vmul.f32 %v1470, %v1476
        %v1492 = vmul.f32 %v1471, %v1476
        %v1493 = vadd.f32 %v1438, %v1477
        %v1494 = vadd.f32 %v1439, %v1478
        %v1495 = vadd.f32 %v1440, %v1479
        %v1496 = vadd.f32 %v1441, %v1480
        %v1497 = vadd.f32 %v1442, %v1481
        %v1498 = vadd.f32 %v1443, %v1482
        %v1499 = vadd.f32 %v1444, %v1483
        %v1500 = vadd.f32 %v1445, %v1484
        %v1501 = vadd.f32 %v1446, %v1485
        %v1502 = vadd.f32 %v1447, %v1486
        %v1503 = vadd.f32 %v1448, %v1487
        %v1504 = vadd.f32 %v1449, %v1488
        %v1505 = vadd.f32 %v1450, %v1489
        %v1506 = vadd.f32 %v1451, %v1490
        %v1507 = vadd.f32 %v1452, %v1491
        %v1508 = vadd.f32 %v1453, %v1492
        %v1509 = vld [vmem:[#allocation2 + $0x98] sm:$0xff]
        %v1510 = vld [vmem:[#allocation2 + $0xa0] sm:$0xff]
        %v1511 = vld [vmem:[%s3 + $0x7] sm:$0x1]
        %v1512 = vlaneseq
        %v1513 = vshrl.u32 %v1512, 7
        %v1514 = vsub.s32 0, %v1513
        %v1515 = vrot.slane %v1511, %v1514
        %v1516 = vmul.f32 %v1334, %v1515
        %v1517 = vmul.f32 %v1335, %v1515
        %v1518 = vmul.f32 %v1336, %v1515
        %v1519 = vmul.f32 %v1337, %v1515
        %v1520 = vmul.f32 %v1338, %v1515
        %v1521 = vmul.f32 %v1339, %v1515
        %v1522 = vmul.f32 %v1340, %v1515
        %v1523 = vmul.f32 %v1341, %v1515
        %v1524 = vmul.f32 %v1342, %v1515
        %v1525 = vmul.f32 %v1343, %v1515
        %v1526 = vmul.f32 %v1344, %v1515
        %v1527 = vmul.f32 %v1345, %v1515
        %v1528 = vmul.f32 %v1346, %v1515
        %v1529 = vmul.f32 %v1347, %v1515
        %v1530 = vmul.f32 %v1509, %v1515
        %v1531 = vmul.f32 %v1510, %v1515
        %v1532 = vadd.f32 %v1493, %v1516
        %v1533 = vadd.f32 %v1494, %v1517
        %v1534 = vadd.f32 %v1495, %v1518
        %v1535 = vadd.f32 %v1496, %v1519
        %v1536 = vadd.f32 %v1497, %v1520
        %v1537 = vadd.f32 %v1498, %v1521
        %v1538 = vadd.f32 %v1499, %v1522
        %v1539 = vadd.f32 %v1500, %v1523
        %v1540 = vadd.f32 %v1501, %v1524
        %v1541 = vadd.f32 %v1502, %v1525
        %v1542 = vadd.f32 %v1503, %v1526
        %v1543 = vadd.f32 %v1504, %v1527
        %v1544 = vadd.f32 %v1505, %v1528
        %v1545 = vadd.f32 %v1506, %v1529
        %v1546 = vadd.f32 %v1507, %v1530
        %v1547 = vadd.f32 %v1508, %v1531
        %v1548 = vld [vmem:[#allocation2 + $0x99] sm:$0xff]
        %v1549 = vld [vmem:[#allocation2 + $0xa1] sm:$0xff]
        %v1550 = vmul.f32 %v1387, %v1133
        %v1551 = vmul.f32 %v1388, %v1138
        %v1552 = vmul.f32 %v1389, %v1143
        %v1553 = vmul.f32 %v1390, %v1148
        %v1554 = vmul.f32 %v1391, %v1153
        %v1555 = vmul.f32 %v1392, %v1158
        %v1556 = vmul.f32 %v1393, %v1163
        %v1557 = vmul.f32 %v1394, %v1168
        %v1558 = vmul.f32 %v1395, %v1173
        %v1559 = vmul.f32 %v1396, %v1178
        %v1560 = vmul.f32 %v1397, %v1183
        %v1561 = vmul.f32 %v1398, %v1188
        %v1562 = vmul.f32 %v1399, %v1193
        %v1563 = vmul.f32 %v1400, %v1198
        %v1564 = vmul.f32 %v1548, %v1203
        %v1565 = vmul.f32 %v1549, %v1208
        %v1566 = vld [vmem:[%s3 + $0x8] sm:$0x1]
        %v1567 = vlaneseq
        %v1568 = vshrl.u32 %v1567, 7
        %v1569 = vsub.s32 0, %v1568
        %v1570 = vrot.slane %v1566, %v1569
        %v1571 = vmul.f32 %v1550, %v1570
        %v1572 = vmul.f32 %v1551, %v1570
        %v1573 = vmul.f32 %v1552, %v1570
        %v1574 = vmul.f32 %v1553, %v1570
        %v1575 = vmul.f32 %v1554, %v1570
        %v1576 = vmul.f32 %v1555, %v1570
        %v1577 = vmul.f32 %v1556, %v1570
        %v1578 = vmul.f32 %v1557, %v1570
        %v1579 = vmul.f32 %v1558, %v1570
        %v1580 = vmul.f32 %v1559, %v1570
        %v1581 = vmul.f32 %v1560, %v1570
        %v1582 = vmul.f32 %v1561, %v1570
        %v1583 = vmul.f32 %v1562, %v1570
        %v1584 = vmul.f32 %v1563, %v1570
        %v1585 = vmul.f32 %v1564, %v1570
        %v1586 = vmul.f32 %v1565, %v1570
        %v1587 = vadd.f32 %v1532, %v1571
        %v1588 = vadd.f32 %v1533, %v1572
        %v1589 = vadd.f32 %v1534, %v1573
        %v1590 = vadd.f32 %v1535, %v1574
        %v1591 = vadd.f32 %v1536, %v1575
        %v1592 = vadd.f32 %v1537, %v1576
        %v1593 = vadd.f32 %v1538, %v1577
        %v1594 = vadd.f32 %v1539, %v1578
        %v1595 = vadd.f32 %v1540, %v1579
        %v1596 = vadd.f32 %v1541, %v1580
        %v1597 = vadd.f32 %v1542, %v1581
        %v1598 = vadd.f32 %v1543, %v1582
        %v1599 = vadd.f32 %v1544, %v1583
        %v1600 = vadd.f32 %v1545, %v1584
        %v1601 = vadd.f32 %v1546, %v1585
        %v1602 = vadd.f32 %v1547, %v1586
        %v1603 = vld [vmem:[%s4] sm:$0x1]
        %v1605 = vlaneseq
        %v1606 = vshrl.u32 %v1605, 7
        %v1607 = vsub.s32 0, %v1606
        %v1608 = vrot.slane %v1603, %v1607
        %v1610 = vadd.f32 %v1587, %v1608
        %v1611 = vadd.f32 %v1588, %v1608
        %v1612 = vadd.f32 %v1589, %v1608
        %v1613 = vadd.f32 %v1590, %v1608
        %v1614 = vadd.f32 %v1591, %v1608
        %v1615 = vadd.f32 %v1592, %v1608
        %v1616 = vadd.f32 %v1593, %v1608
        %v1617 = vadd.f32 %v1594, %v1608
        %v1618 = vadd.f32 %v1595, %v1608
        %v1619 = vadd.f32 %v1596, %v1608
        %v1620 = vadd.f32 %v1597, %v1608
        %v1621 = vadd.f32 %v1598, %v1608
        %v1622 = vadd.f32 %v1599, %v1608
        %v1623 = vadd.f32 %v1600, %v1608
        %v1624 = vadd.f32 %v1601, %v1608
        %v1625 = vadd.f32 %v1602, %v1608
        %v1626 = vmax.f32 %v1610, 0.0
        %v1627 = vmax.f32 %v1611, 0.0
        %v1628 = vmax.f32 %v1612, 0.0
        %v1629 = vmax.f32 %v1613, 0.0
        %v1630 = vmax.f32 %v1614, 0.0
        %v1631 = vmax.f32 %v1615, 0.0
        %v1632 = vmax.f32 %v1616, 0.0
        %v1633 = vmax.f32 %v1617, 0.0
        %v1634 = vmax.f32 %v1618, 0.0
        %v1635 = vmax.f32 %v1619, 0.0
        %v1636 = vmax.f32 %v1620, 0.0
        %v1637 = vmax.f32 %v1621, 0.0
        %v1638 = vmax.f32 %v1622, 0.0
        %v1639 = vmax.f32 %v1623, 0.0
        %v1640 = vmax.f32 %v1624, 0.0
        %v1641 = vmax.f32 %v1625, 0.0
        %v1642 = vmin.f32 %v1626, 6.0
        %v1643 = vmin.f32 %v1627, 6.0
        %v1644 = vmin.f32 %v1628, 6.0
        %v1645 = vmin.f32 %v1629, 6.0
        %v1646 = vmin.f32 %v1630, 6.0
        %v1647 = vmin.f32 %v1631, 6.0
        %v1648 = vmin.f32 %v1632, 6.0
        %v1649 = vmin.f32 %v1633, 6.0
        %v1650 = vmin.f32 %v1634, 6.0
        %v1651 = vmin.f32 %v1635, 6.0
        %v1652 = vmin.f32 %v1636, 6.0
        %v1653 = vmin.f32 %v1637, 6.0
        %v1654 = vmin.f32 %v1638, 6.0
        %v1655 = vmin.f32 %v1639, 6.0
        %v1656 = vmin.f32 %v1640, 6.0
        %v1657 = vmin.f32 %v1641, 6.0
        %v1658 = vpack.c.bf16 %v1643, %v1642
        %v1659 = vpack.c.bf16 %v1645, %v1644
        %v1660 = vpack.c.bf16 %v1647, %v1646
        %v1661 = vpack.c.bf16 %v1649, %v1648
        %v1662 = vpack.c.bf16 %v1651, %v1650
        %v1663 = vpack.c.bf16 %v1653, %v1652
        %v1664 = vpack.c.bf16 %v1655, %v1654
        %v1665 = vpack.c.bf16 %v1657, %v1656
        %v1666 = vld [vmem:[%s5] sm:$0xf]
        %v1667 = vld [vmem:[%s5 + $0x4] sm:$0xf]
        %v1668 = vld [vmem:[%s5 + $0x8] sm:$0xf]
        %v1669 = vld [vmem:[%s5 + $0xc] sm:$0xf]
        %v1670 = vld [vmem:[%s5 + $0x10] sm:$0xf]
        %v1671 = vld [vmem:[%s5 + $0x14] sm:$0xf]
        %v1672 = vld [vmem:[%s5 + $0x18] sm:$0xf]
        %v1673 = vld [vmem:[%s5 + $0x1c] sm:$0xf]
        %v1674 = vld [vmem:[%s5 + $0x20] sm:$0xf]
        %v1675 = vld [vmem:[%s5 + $0x24] sm:$0xf]
        %v1676 = vld [vmem:[%s5 + $0x28] sm:$0xf]
        %v1677 = vld [vmem:[%s5 + $0x2c] sm:$0xf]
        %v1678 = vld [vmem:[%s5 + $0x30] sm:$0xf]
        %v1679 = vld [vmem:[%s5 + $0x34] sm:$0xf]
        %v1680 = vld [vmem:[%s5 + $0x38] sm:$0xf]
        %v1681 = vld [vmem:[%s5 + $0x3c] sm:$0xf]
        %v1682 = vld [vmem:[%s6] sm:$0x1]
        %v1684 = vlaneseq
        %v1685 = vshrl.u32 %v1684, 7
        %v1686 = vsub.s32 0, %v1685
        %v1687 = vrot.slane %v1682, %v1686
        %v1705 = vunpack.c.l.b16 %v1666
        %v1706 = vunpack.c.l.b16 %v1667
        %v1707 = vunpack.c.l.b16 %v1668
        %v1708 = vunpack.c.l.b16 %v1669
        %v1709 = vunpack.c.l.b16 %v1670
        %v1710 = vunpack.c.l.b16 %v1671
        %v1711 = vunpack.c.l.b16 %v1672
        %v1712 = vunpack.c.l.b16 %v1673
        %v1713 = vunpack.c.l.b16 %v1674
        %v1714 = vunpack.c.l.b16 %v1675
        %v1715 = vunpack.c.l.b16 %v1676
        %v1716 = vunpack.c.l.b16 %v1677
        %v1717 = vunpack.c.l.b16 %v1678
        %v1718 = vunpack.c.l.b16 %v1679
        %v1719 = vunpack.c.l.b16 %v1680
        %v1720 = vunpack.c.l.b16 %v1681
        %v1721 = vpack.c.b16 %v1706, %v1705
        %v1722 = vpack.c.b16 %v1708, %v1707
        %v1723 = vpack.c.b16 %v1710, %v1709
        %v1724 = vpack.c.b16 %v1712, %v1711
        %v1725 = vpack.c.b16 %v1714, %v1713
        %v1726 = vpack.c.b16 %v1716, %v1715
        %v1727 = vpack.c.b16 %v1718, %v1717
        %v1728 = vpack.c.b16 %v1720, %v1719
        %1737 = vmatprep.subr.bf16.mxu0 0
        %1738 = vmatpush1.bf16.msra.mxu0 %v1721
        %1739 = vmatprep.subr.bf16.mxu0 0
        %1740 = vmatpush1.bf16.msra.mxu0 %v1722
        %1741 = vmatprep.subr.bf16.mxu0 0
        %1742 = vmatpush1.bf16.msra.mxu0 %v1723
        %1743 = vmatprep.subr.bf16.mxu0 0
        %1744 = vmatpush1.bf16.msra.mxu0 %v1724
        %1745 = vmatprep.subr.bf16.mxu0 0
        %1746 = vmatpush1.bf16.msra.mxu0 %v1725
        %1747 = vmatprep.subr.bf16.mxu0 0
        %1748 = vmatpush1.bf16.msra.mxu0 %v1726
        %1749 = vmatprep.subr.bf16.mxu0 0
        %1750 = vmatpush1.bf16.msra.mxu0 %v1727
        %1751 = vmatprep.subr.bf16.mxu0 0
        %1752 = vmatpush1.bf16.msra.mxu0 %v1728
        %1753 = vmatprep.subr.bf16.mxu0 0
        %1754 = vmatpush1.bf16.msra.mxu0 0
        %1755 = vmatprep.subr.bf16.mxu0 0
        %1756 = vmatpush1.bf16.msra.mxu0 0
        %1757 = vmatprep.subr.bf16.mxu0 0
        %1758 = vmatpush1.bf16.msra.mxu0 0
        %1759 = vmatprep.subr.bf16.mxu0 0
        %1760 = vmatpush1.bf16.msra.mxu0 0
        %1761 = vmatprep.subr.bf16.mxu0 0
        %1762 = vmatpush1.bf16.msra.mxu0 0
        %1763 = vmatprep.subr.bf16.mxu0 0
        %1764 = vmatpush1.bf16.msra.mxu0 0
        %1765 = vmatprep.subr.bf16.mxu0 0
        %1766 = vmatpush1.bf16.msra.mxu0 0
        %1767 = vmatprep.subr.bf16.mxu0 0
        %1768 = vmatpush1.bf16.msra.mxu0 0
        %1769 = vmatprep.mubr.bf16.mxu0 0
        %1770 = vmatmul.mubr.bf16.gmra.mrb[0].mxu0 %v1658
        %v1771 = vpop.f32.mrb[0].mxu0
        %v1772 = vadd.f32 %v1687, %v1771
        %v1773 = vpop.f32.mrb[0].mxu0
        %v1774 = vpop.f32.mrb[0].mxu0
        %v1775 = vadd.f32 %v1687, %v1774
        %v1776 = vpop.f32.mrb[0].mxu0
        %1777 = vmatprep.mubr.bf16.mxu0 0
        %1778 = vmatmul.mubr.bf16.gmra.mrb[0].mxu0 %v1659
        %v1779 = vpop.f32.mrb[0].mxu0
        %v1780 = vadd.f32 %v1687, %v1779
        %v1781 = vpop.f32.mrb[0].mxu0
        %v1782 = vpop.f32.mrb[0].mxu0
        %v1783 = vadd.f32 %v1687, %v1782
        %v1784 = vpop.f32.mrb[0].mxu0
        %1785 = vmatprep.mubr.bf16.mxu0 0
        %1786 = vmatmul.mubr.bf16.gmra.mrb[0].mxu0 %v1660
        %v1787 = vpop.f32.mrb[0].mxu0
        %v1788 = vadd.f32 %v1687, %v1787
        %v1789 = vpop.f32.mrb[0].mxu0
        %v1790 = vpop.f32.mrb[0].mxu0
        %v1791 = vadd.f32 %v1687, %v1790
        %v1792 = vpop.f32.mrb[0].mxu0
        %1793 = vmatprep.mubr.bf16.mxu0 0
        %1794 = vmatmul.mubr.bf16.gmra.mrb[0].mxu0 %v1661
        %v1795 = vpop.f32.mrb[0].mxu0
        %v1796 = vadd.f32 %v1687, %v1795
        %v1797 = vpop.f32.mrb[0].mxu0
        %v1798 = vpop.f32.mrb[0].mxu0
        %v1799 = vadd.f32 %v1687, %v1798
        %v1800 = vpop.f32.mrb[0].mxu0
        %1801 = vmatprep.mubr.bf16.mxu0 0
        %1802 = vmatmul.mubr.bf16.gmra.mrb[0].mxu0 %v1662
        %v1803 = vpop.f32.mrb[0].mxu0
        %v1804 = vadd.f32 %v1687, %v1803
        %v1805 = vpop.f32.mrb[0].mxu0
        %v1806 = vpop.f32.mrb[0].mxu0
        %v1807 = vadd.f32 %v1687, %v1806
        %v1808 = vpop.f32.mrb[0].mxu0
        %1809 = vmatprep.mubr.bf16.mxu0 0
        %1810 = vmatmul.mubr.bf16.gmra.mrb[0].mxu0 %v1663
        %v1811 = vpop.f32.mrb[0].mxu0
        %v1812 = vadd.f32 %v1687, %v1811
        %v1813 = vpop.f32.mrb[0].mxu0
        %v1814 = vpop.f32.mrb[0].mxu0
        %v1815 = vadd.f32 %v1687, %v1814
        %v1816 = vpop.f32.mrb[0].mxu0
        %1817 = vmatprep.mubr.bf16.mxu0 0
        %1818 = vmatmul.mubr.bf16.gmra.mrb[0].mxu0 %v1664
        %v1819 = vpop.f32.mrb[0].mxu0
        %v1820 = vadd.f32 %v1687, %v1819
        %v1821 = vpop.f32.mrb[0].mxu0
        %v1822 = vpop.f32.mrb[0].mxu0
        %v1823 = vadd.f32 %v1687, %v1822
        %v1824 = vpop.f32.mrb[0].mxu0
        %1825 = vmatprep.mubr.bf16.mxu0 0
        %1826 = vmatmul.mubr.bf16.gmra.mrb[0].mxu0 %v1665
        %v1827 = vpop.f32.mrb[0].mxu0
        %v1828 = vadd.f32 %v1687, %v1827
        %v1829 = vpop.f32.mrb[0].mxu0
        %v1830 = vpop.f32.mrb[0].mxu0
        %v1831 = vadd.f32 %v1687, %v1830
        %v1832 = vpop.f32.mrb[0].mxu0
        %1833 = vdwg.mxu0
        %v1834 = vld [vmem:[%s370] sm:$0xff]
        %v1835 = vld [vmem:[%s370 + $0x8] sm:$0xff]
        %v1836 = vld [vmem:[%s370 + $0x10] sm:$0xff]
        %v1837 = vld [vmem:[%s370 + $0x18] sm:$0xff]
        %v1838 = vld [vmem:[%s370 + $0x20] sm:$0xff]
        %v1839 = vld [vmem:[%s370 + $0x28] sm:$0xff]
        %v1840 = vld [vmem:[%s370 + $0x30] sm:$0xff]
        %v1841 = vld [vmem:[%s370 + $0x38] sm:$0xff]
        %v1842 = vld [vmem:[%s370 + $0x40] sm:$0xff]
        %v1843 = vld [vmem:[%s370 + $0x48] sm:$0xff]
        %v1844 = vld [vmem:[%s370 + $0x50] sm:$0xff]
        %v1845 = vld [vmem:[%s370 + $0x58] sm:$0xff]
        %v1846 = vld [vmem:[%s370 + $0x60] sm:$0xff]
        %v1847 = vld [vmem:[%s370 + $0x68] sm:$0xff]
        %v1848 = vld [vmem:[%s370 + $0x70] sm:$0xff]
        %v1849 = vld [vmem:[%s370 + $0x78] sm:$0xff]
        %v1850 = vadd.f32 %v1772, %v1834
        %v1851 = vadd.f32 %v1775, %v1835
        %v1852 = vadd.f32 %v1780, %v1836
        %v1853 = vadd.f32 %v1783, %v1837
        %v1854 = vadd.f32 %v1788, %v1838
        %v1855 = vadd.f32 %v1791, %v1839
        %v1856 = vadd.f32 %v1796, %v1840
        %v1857 = vadd.f32 %v1799, %v1841
        %v1858 = vadd.f32 %v1804, %v1842
        %v1859 = vadd.f32 %v1807, %v1843
        %v1860 = vadd.f32 %v1812, %v1844
        %v1861 = vadd.f32 %v1815, %v1845
        %v1862 = vadd.f32 %v1820, %v1846
        %v1863 = vadd.f32 %v1823, %v1847
        %v1864 = vadd.f32 %v1828, %v1848
        %v1865 = vadd.f32 %v1831, %v1849
        %1866 = vst [vmem:[%s364] sm:$0xff] %v1850
        %1867 = vst [vmem:[%s364 + $0x8] sm:$0xff] %v1851
        %1868 = vst [vmem:[%s364 + $0x10] sm:$0xff] %v1852
        %1869 = vst [vmem:[%s364 + $0x18] sm:$0xff] %v1853
        %1870 = vst [vmem:[%s364 + $0x20] sm:$0xff] %v1854
        %1871 = vst [vmem:[%s364 + $0x28] sm:$0xff] %v1855
        %1872 = vst [vmem:[%s364 + $0x30] sm:$0xff] %v1856
        %1873 = vst [vmem:[%s364 + $0x38] sm:$0xff] %v1857
        %1874 = vst [vmem:[%s364 + $0x40] sm:$0xff] %v1858
        %1875 = vst [vmem:[%s364 + $0x48] sm:$0xff] %v1859
        %1876 = vst [vmem:[%s364 + $0x50] sm:$0xff] %v1860
        %1877 = vst [vmem:[%s364 + $0x58] sm:$0xff] %v1861
        %1878 = vst [vmem:[%s364 + $0x60] sm:$0xff] %v1862
        %1879 = vst [vmem:[%s364 + $0x68] sm:$0xff] %v1863
        %1880 = vst [vmem:[%s364 + $0x70] sm:$0xff] %v1864
        %1881 = vst [vmem:[%s364 + $0x78] sm:$0xff] %v1865
        %s1882 = sand.u32 %s242, 1
        %s1883 = scalar_lea.sflag [#allocation5], %s1882
        %s1884 = sand.u32 %s242, 1
        %s1885 = smul.addr %s1884, 128
        %s1886 = scalar_lea.vmem [#allocation6], %s1885
        // Predicated region
        $region77: #{tpu_custom_call.1} parent=55 // pred_check
          %p1887 = pneg %p252
        $region78: #{tpu_custom_call.1} parent=55 // pred_check_branch
          %1889 = sbr.rel (%p1887) target = $region80
        $region79: #{tpu_custom_call.1} parent=55 // pred_region
          %s1890 = smul.u32 16, %s31
          %s1892 = ssub.s32 2048, 2048
          %1893 = vsyncadd %s1883, %s1892
          %s1894 = smul.addr %s30, 32
          %s1895 = sadd.s32 %s1890, %s1894
          %s1896 = smul.addr %s1895, 128
          %s1897 = scalar_lea.hbm %s9, %s1896
          %s1898 = sshll.u32 %s1886, 4
          %s1899 = int_to_ptr.vmem [resolvable:$true] %s1898
          %1904 = dma.vmem_to_hbm [thread:$0]  %s1899, 2048, %s1897, %s1883, 128, 128, 8
        $region80: #{tpu_custom_call.1} parent=55 // pred_fallthru
          _
      $region56: #{tpu_custom_call.1} parent=5 // pred_fallthru
        _
      %p1905 = scmp.le.s32.totalorder 2, %s21
      // Predicated region
      $region81: #{tpu_custom_call.1} parent=5 // pred_check
        %p1906 = pneg %p1905
      $region82: #{tpu_custom_call.1} parent=5 // pred_check_branch
        %1908 = sbr.rel (%p1906) target = $region84
      $region83: #{tpu_custom_call.1} parent=5 // pred_region
        %s1909 = ssub.s32 %s21, 2
        // Predicated region
        $region85: #{tpu_custom_call.1} parent=83 // pred_check
          %p1910 = pneg %p258
        $region86: #{tpu_custom_call.1} parent=83 // pred_check_branch
          %1912 = sbr.rel (%p1910) target = $region88
        $region87: #{tpu_custom_call.1} parent=83 // pred_region
          %s1913 = sand.u32 %s243, 1
          %s1914 = scalar_lea.sflag [#allocation5], %s1913
          %s1915 = sand.u32 %s243, 1
          %s1916 = smul.addr %s1915, 128
          %s1917 = scalar_lea.vmem [#allocation6], %s1916
          %1918 = dma.done %s1914, 2048
        $region88: #{tpu_custom_call.1} parent=83 // pred_fallthru
          _
      $region84: #{tpu_custom_call.1} parent=5 // pred_fallthru
        _
    $region6: #{tpu_custom_call.1} parent=1 // loop_footer
      %s25 = sadd.s32 1, %s21
    $region7: #{tpu_custom_call.1} parent=1 // loop_footer_branch
      %20 = sbr.rel target = $region3
    $region8: #{tpu_custom_call.1} parent=1 // loop_exit
      _
    %1919 = vsyncpa [#allocation4], 1
    %s1920 = scalar_lea.sflag [#allocation4], 1
    %1921 = vsyncpa %s1920, 1
    %1922 = vsyncpa [#allocation5], 1
    %s1923 = scalar_lea.sflag [#allocation5], 1
    %1924 = vsyncpa %s1923, 1

</llo_original>
